<compile_context>
chip_gen: v7x
topology: tpu7x:2x2x1
jax: 0.10.0
libtpu: 0.0.40
codegen_flags: <defaults>
</compile_context>

<pallas_src>
import functools
import math

import jax
import jax.numpy as jnp
from jax.experimental import pallas as pl
from jax.experimental.pallas import tpu as pltpu


def _mha_body(xq_ref, xk_ref, xv_ref,
              wq_ref, bq_ref, wk_ref, bk_ref, wv_ref, bv_ref,
              wo_ref, bo_ref,
              o_ref, ctx_ref,
              *, head_block, d_k, n_head_blocks):
    g = pl.program_id(1)                       # head-block index (inner, "arbitrary")
    bb, S, D = o_ref.shape
    hbdk = head_block * d_k
    cdt = xq_ref.dtype                         # MXU input dtype (bf16 by default)

    # ---- load activation block(s) once per step ----------------------------
    # Self-attention fast path: all three refs alias the same VMEM block.
    xq = xq_ref[...].reshape(bb * S, D)
    if xk_ref is xq_ref:
        xk = xq
    else:
        xk = xk_ref[...].reshape(bb * S, D)
    if xv_ref is xq_ref:
        xv = xq
    elif xv_ref is xk_ref:
        xv = xk
    else:
        xv = xv_ref[...].reshape(bb * S, D)

    # ---- grouped projections for this head block ---------------------------
    # One (bb*S, D) x (D, head_block*d_k) matmul each, f32 accumulation.
    # Weights are pre-transposed and per-block sliced by the wrapper; the
    # 1/sqrt(d_k) attention scale is folded into Wq / bq.
    Qg = jnp.dot(xq, wq_ref[0], preferred_element_type=jnp.float32) + bq_ref[0]
    Kg = jnp.dot(xk, wk_ref[0], preferred_element_type=jnp.float32) + bk_ref[0]
    Vg = jnp.dot(xv, wv_ref[0], preferred_element_type=jnp.float32) + bv_ref[0]
    Qg = Qg.reshape(bb, S, hbdk)
    Kg = Kg.reshape(bb, S, hbdk)
    Vg = Vg.reshape(bb, S, hbdk)

    # ---- scaled dot-product attention, per head (static unroll) ------------
    # TODO(synk): attention mask (masked_fill -1e9) and dropout are not wired
    #             up; the reference forward is exercised with mask=None, eval.
    # TODO(synk): for long S add a KV grid axis with online softmax (flash
    #             pattern) instead of materializing (bb, S, S) f32 scores
    #             (needed once bb*S*S*4 bytes ~ 8-16 MiB, esp. v7x 64 MiB VMEM).
    for j in range(head_block):
        lo = j * d_k
        Qh = Qg[:, :, lo:lo + d_k].astype(cdt)
        Kh = Kg[:, :, lo:lo + d_k].astype(cdt)
        Vh = Vg[:, :, lo:lo + d_k].astype(cdt)
        s = jnp.einsum('bqd,bkd->bqk', Qh, Kh,
                       preferred_element_type=jnp.float32)        # (bb, S, S) f32
        s = s - jnp.max(s, axis=-1, keepdims=True)
        p = jnp.exp(s)
        p = p / jnp.sum(p, axis=-1, keepdims=True)   # exact division (parity w/ torch)
        ctx = jnp.einsum('bqk,bkd->bqd', p.astype(cdt), Vh,
                         preferred_element_type=jnp.float32)      # (bb, S, d_k)
        # Write-only scatter of this head's context into the persistent VMEM
        # scratch (no read-modify-write f32 accumulator passes over (bb*S, D)).
        ctx_ref[g, :, lo:lo + d_k] = (
            ctx.reshape(bb * S, d_k).astype(ctx_ref.dtype))

    # ---- epilogue: one full-depth output projection -------------------------
    # concat @ Wo.T == sum over head blocks of ctx_g @ Wo.T[g*hbdk:(g+1)*hbdk, :]
    # (each partial matmul has contraction K = head_block*d_k >= 128 when grouped).
    @pl.when(g == n_head_blocks - 1)
    def _():
        acc = jnp.dot(ctx_ref[0], wo_ref[0], preferred_element_type=jnp.float32)
        for gg in range(1, n_head_blocks):
            acc = acc + jnp.dot(ctx_ref[gg], wo_ref[gg],
                                preferred_element_type=jnp.float32)
        out = acc + bo_ref[...]
        o_ref[...] = out.reshape(bb, S, D).astype(o_ref.dtype)


def _make_kernel(self_attn, head_block, d_k, n_head_blocks):
    body = functools.partial(_mha_body, head_block=head_block, d_k=d_k,
                             n_head_blocks=n_head_blocks)
    if self_attn:
        def kernel(x_ref, wq_ref, bq_ref, wk_ref, bk_ref, wv_ref, bv_ref,
                   wo_ref, bo_ref, o_ref, ctx_ref):
            body(x_ref, x_ref, x_ref, wq_ref, bq_ref, wk_ref, bk_ref,
                 wv_ref, bv_ref, wo_ref, bo_ref, o_ref, ctx_ref)
    else:
        def kernel(q_ref, k_ref, v_ref, wq_ref, bq_ref, wk_ref, bk_ref,
                   wv_ref, bv_ref, wo_ref, bo_ref, o_ref, ctx_ref):
            body(q_ref, k_ref, v_ref, wq_ref, bq_ref, wk_ref, bk_ref,
                 wv_ref, bv_ref, wo_ref, bo_ref, o_ref, ctx_ref)
    return kernel


def _vmem_capacity_bytes():
    try:
        info = pltpu.get_tpu_info()
        cap = getattr(info, "vmem_capacity_bytes", None)
        if cap:
            return int(cap)
    except Exception:
        pass
    return 64 * 1024 * 1024          # conservative (v7x per-TC physical VMEM)


def multi_head_attention(q, k, v, params, *, heads, batch_block=None,
                         head_block=None, mxu_dtype="auto"):
    """Forward pass of MultiHeadAttention (mask=None, eval mode).

    batch_block: batches per grid step.  Default: largest divisor of B that
      fits the VMEM budget while keeping >= 2 batch steps (dual-TC on v7x,
      input-DMA overlap elsewhere).
    head_block: heads per grid step.  Default: smallest divisor of `heads`
      with head_block*d_k >= 128 (fills MXU output lanes); falls back to all
      heads for small d_model.
    mxu_dtype: "auto" (default) casts f32 activations/weights to bf16 for the
      MXU (f32 accumulation + f32 softmax kept); None keeps the input dtype;
      or pass an explicit dtype.
    """
    B, S, D = q.shape
    assert D % heads == 0
    d_k = D // heads
    out_dtype = q.dtype
    wq, bq, wk, bk, wv, bv, wo, bo = params

    # ---- compute (MXU input) dtype ------------------------------------------
    if isinstance(mxu_dtype, str) and mxu_dtype == "auto":
        cdt = jnp.bfloat16 if q.dtype == jnp.float32 else q.dtype
    elif mxu_dtype is None:
        cdt = q.dtype
    else:
        cdt = jnp.dtype(mxu_dtype)

    # ---- head grouping -------------------------------------------------------
    if head_block is None:
        head_block = heads
        for cand in range(1, heads + 1):
            if heads % cand == 0 and cand * d_k >= 128:
                head_block = cand
                break
    assert heads % head_block == 0
    n_hb = heads // head_block
    hbdk = head_block * d_k

    self_attn = (q is k) and (k is v)
    n_act = 1 if self_attn else 3

    in_bytes = jnp.dtype(cdt).itemsize
    out_bytes = jnp.dtype(out_dtype).itemsize

    # ---- VMEM-aware batch_block selection + explicit vmem limit -------------
    vmem_cap = _vmem_capacity_bytes()
    vmem_limit = max(32 * 1024 * 1024,
                     min(int(vmem_cap * 0.80), 112 * 1024 * 1024))
    budget = int(vmem_limit * 0.85)

    if batch_block is None:
        def vmem_est(bb):
            act = n_act * 2 * bb * S * D * in_bytes        # double-buffered inputs
            out = 2 * bb * S * D * out_bytes               # double-buffered output
            ctx = bb * S * D * in_bytes                    # ctx scatter scratch
            wts = 3 * 2 * D * hbdk * in_bytes + D * D * in_bytes + 8 * D * 4
            work = (3 * bb * S * hbdk * 4                  # Qg/Kg/Vg f32
                    + 2 * bb * S * S * 4                   # scores + probs f32
                    + bb * S * D * 4)                      # epilogue accumulator
            return act + out + ctx + wts + work
        batch_block = 1
        for bb in range(1, B + 1):
            if B % bb:
                continue
            if B >= 2 and B // bb < 2:   # keep >= 2 batch grid steps
                continue
            if vmem_est(bb) <= budget:
                batch_block = max(batch_block, bb)
    assert B % batch_block == 0
    grid_b = B // batch_block

    # ---- wrapper-side layout plumbing (free) ---------------------------------
    scale = 1.0 / math.sqrt(d_k)

    def split_in_proj(w, b, s=1.0):
        # nn.Linear weight (out, in) -> (n_hb, D, head_block*d_k), head-major cols.
        wt = (w.T * s).reshape(D, n_hb, hbdk).transpose(1, 0, 2).astype(cdt)
        bh = (b * s).reshape(n_hb, 1, hbdk).astype(jnp.float32)
        return wt, bh

    wq_h, bq_h = split_in_proj(wq, bq, scale)       # 1/sqrt(d_k) folded into Q proj
    wk_h, bk_h = split_in_proj(wk, bk)
    wv_h, bv_h = split_in_proj(wv, bv)
    wo_h = wo.T.reshape(n_hb, hbdk, D).astype(cdt)  # (n_hb, head_block*d_k, D)
    bo2 = bo.reshape(1, D).astype(jnp.float32)

    q = q.astype(cdt)
    if not self_attn:
        k = k.astype(cdt)
        v = v.astype(cdt)

    # ---- BlockSpecs ----------------------------------------------------------
    act_spec = pl.BlockSpec((batch_block, S, D), lambda b, g: (b, 0, 0))
    wi_spec = pl.BlockSpec((1, D, hbdk), lambda b, g: (g, 0, 0))
    bi_spec = pl.BlockSpec((1, 1, hbdk), lambda b, g: (g, 0, 0))
    wo_spec = pl.BlockSpec((n_hb, hbdk, D), lambda b, g: (0, 0, 0))  # resident
    bo_spec = pl.BlockSpec((1, D), lambda b, g: (0, 0))              # resident
    out_spec = pl.BlockSpec((batch_block, S, D), lambda b, g: (b, 0, 0))

    acts = (q,) if self_attn else (q, k, v)
    kernel = _make_kernel(self_attn, head_block, d_k, n_hb)

    return pl.pallas_call(
        kernel,
        out_shape=jax.ShapeDtypeStruct((B, S, D), out_dtype),
        grid_spec=pltpu.PrefetchScalarGridSpec(
            num_scalar_prefetch=0,
            grid=(grid_b, n_hb),
            in_specs=[act_spec] * n_act + [wi_spec, bi_spec,
                                           wi_spec, bi_spec,
                                           wi_spec, bi_spec,
                                           wo_spec, bo_spec],
            out_specs=out_spec,
            scratch_shapes=[pltpu.VMEM((n_hb, batch_block * S, hbdk), cdt)],
        ),
        compiler_params=pltpu.CompilerParams(
            dimension_semantics=("parallel", "arbitrary"),
            vmem_limit_bytes=vmem_limit),
    )(*acts, wq_h, bq_h, wk_h, bk_h, wv_h, bv_h, wo_h, bo2)


def mha_reference(q, k, v, params, *, heads):
    """Pure-JAX reference mirroring the PyTorch forward (mask=None, eval)."""
    B, S, D = q.shape
    d_k = D // heads
    wq, bq, wk, bk, wv, bv, wo, bo = params

    def proj(x, w, b):
        return x @ w.T + b

    def split(x):  # (B,S,D) -> (B,H,S,d_k)
        return x.reshape(B, S, heads, d_k).transpose(0, 2, 1, 3)

    Q, K, V = split(proj(q, wq, bq)), split(proj(k, wk, bk)), split(proj(v, wv, bv))
    scores = jnp.einsum("bhqd,bhkd->bhqk", Q, K) / math.sqrt(d_k)
    p = jax.nn.softmax(scores, axis=-1)
    ctx = jnp.einsum("bhqk,bhkd->bhqd", p, V)
    concat = ctx.transpose(0, 2, 1, 3).reshape(B, S, D)
    return concat @ wo.T + bo


if __name__ == "__main__":
    B, S, D, H = 2, 8, 32, 4   # batch, seq, d_model, heads

    key = jax.random.PRNGKey(0)
    keys = jax.random.split(key, 12)
    scale = 1.0 / math.sqrt(D)

    # Deterministic synthetic parameters (shapes from nn.Linear(d_model, d_model)).
    wq = jax.random.uniform(keys[0], (D, D), jnp.float32, -scale, scale)
    bq = jax.random.uniform(keys[1], (D,), jnp.float32, -scale, scale)
    wk = jax.random.uniform(keys[2], (D, D), jnp.float32, -scale, scale)
    bk = jax.random.uniform(keys[3], (D,), jnp.float32, -scale, scale)
    wv = jax.random.uniform(keys[4], (D, D), jnp.float32, -scale, scale)
    bv = jax.random.uniform(keys[5], (D,), jnp.float32, -scale, scale)
    wo = jax.random.uniform(keys[6], (D, D), jnp.float32, -scale, scale)
    bo = jax.random.uniform(keys[7], (D,), jnp.float32, -scale, scale)
    params = (wq, bq, wk, bk, wv, bv, wo, bo)

    q = jax.random.normal(keys[8], (B, S, D), jnp.float32)
    k = jax.random.normal(keys[9], (B, S, D), jnp.float32)
    v = jax.random.normal(keys[10], (B, S, D), jnp.float32)

    ref = mha_reference(q, k, v, params, heads=H)

    # 1) f32 MXU path: bit-close parity with the reference.
    out_f32 = jax.block_until_ready(
        multi_head_attention(q, k, v, params, heads=H, mxu_dtype=None))
    assert out_f32.shape == (B, S, D)
    err_f32 = jnp.max(jnp.abs(out_f32 - ref))
    assert jnp.allclose(out_f32, ref, atol=1e-3, rtol=1e-3), \
        f"f32 path mismatch vs reference (max abs err {err_f32})"

    # 2) Default path: bf16 MXU inputs, f32 accumulation/softmax.
    out_bf = jax.block_until_ready(
        multi_head_attention(q, k, v, params, heads=H))
    err_bf = jnp.max(jnp.abs(out_bf - ref))
    assert jnp.allclose(out_bf, ref, atol=5e-2, rtol=5e-2), \
        f"bf16 path mismatch vs reference (max abs err {err_bf})"

    # 3) Self-attention fast path (single activation DMA).
    ref_self = mha_reference(q, q, q, params, heads=H)
    out_self = jax.block_until_ready(
        multi_head_attention(q, q, q, params, heads=H))
    err_self = jnp.max(jnp.abs(out_self - ref_self))
    assert jnp.allclose(out_self, ref_self, atol=5e-2, rtol=5e-2), \
        f"self-attention path mismatch vs reference (max abs err {err_self})"

    print("KERNEL_OK")
</pallas_src>

<mosaic_0001>
module attributes {stable_mosaic.version = 11 : i64} {
  func.func @kernel(%arg0: i32, %arg1: i32, %arg2: memref<1x8x32xf32, #tpu.memory_space<vmem>>, %arg3: memref<1x8x32xf32, #tpu.memory_space<vmem>>, %arg4: memref<1x8x32xf32, #tpu.memory_space<vmem>>, %arg5: memref<1x32x32xf32, #tpu.memory_space<vmem>>, %arg6: memref<1x1x32xf32, #tpu.memory_space<vmem>>, %arg7: memref<1x32x32xf32, #tpu.memory_space<vmem>>, %arg8: memref<1x1x32xf32, #tpu.memory_space<vmem>>, %arg9: memref<1x32x32xf32, #tpu.memory_space<vmem>>, %arg10: memref<1x1x32xf32, #tpu.memory_space<vmem>>, %arg11: memref<1x32x32xf32, #tpu.memory_space<vmem>>, %arg12: memref<1x32xf32, #tpu.memory_space<vmem>>, %arg13: memref<1x8x32xf32, #tpu.memory_space<vmem>>, %arg14: memref<1x8x32xf32, #tpu.memory_space<vmem>>) attributes {dimension_semantics = [#tpu.dimension_semantics<parallel>, #tpu.dimension_semantics<arbitrary>], iteration_bounds = array<i64: 2, 1>, scalar_prefetch = 0 : i64, scratch_operands = 1 : i64, tpu.core_type = #tpu.core_type<tc>, window_params = [{transform_indices = @transform_0, window_bounds = array<i64: 1, 8, 32>}, {transform_indices = @transform_1, window_bounds = array<i64: 1, 8, 32>}, {transform_indices = @transform_2, window_bounds = array<i64: 1, 8, 32>}, {transform_indices = @transform_3, window_bounds = array<i64: 1, 32, 32>}, {transform_indices = @transform_4, window_bounds = array<i64: 1, 1, 32>}, {transform_indices = @transform_5, window_bounds = array<i64: 1, 32, 32>}, {transform_indices = @transform_6, window_bounds = array<i64: 1, 1, 32>}, {transform_indices = @transform_7, window_bounds = array<i64: 1, 32, 32>}, {transform_indices = @transform_8, window_bounds = array<i64: 1, 1, 32>}, {pipeline_mode = #tpu.pipeline_mode<synchronous>, transform_indices = @transform_9, window_bounds = array<i64: 1, 32, 32>}, {pipeline_mode = #tpu.pipeline_mode<synchronous>, transform_indices = @transform_10, window_bounds = array<i64: 1, 32>}, {transform_indices = @transform_11, window_bounds = array<i64: 1, 8, 32>}]} {
    %c0 = arith.constant 0 : index
    %c0_0 = arith.constant 0 : index
    %c0_1 = arith.constant 0 : index
    %0 = vector.load %arg2[%c0, %c0_0, %c0_1] : memref<1x8x32xf32, #tpu.memory_space<vmem>>, vector<1x8x32xf32>
    %1 = vector.shape_cast %0 : vector<1x8x32xf32> to vector<8x32xf32>
    %c0_2 = arith.constant 0 : index
    %c0_3 = arith.constant 0 : index
    %c0_4 = arith.constant 0 : index
    %2 = vector.load %arg3[%c0_2, %c0_3, %c0_4] : memref<1x8x32xf32, #tpu.memory_space<vmem>>, vector<1x8x32xf32>
    %3 = vector.shape_cast %2 : vector<1x8x32xf32> to vector<8x32xf32>
    %c0_5 = arith.constant 0 : index
    %c0_6 = arith.constant 0 : index
    %c0_7 = arith.constant 0 : index
    %4 = vector.load %arg4[%c0_5, %c0_6, %c0_7] : memref<1x8x32xf32, #tpu.memory_space<vmem>>, vector<1x8x32xf32>
    %5 = vector.shape_cast %4 : vector<1x8x32xf32> to vector<8x32xf32>
    %c0_8 = arith.constant 0 : index
    %c0_9 = arith.constant 0 : index
    %c0_10 = arith.constant 0 : index
    %6 = vector.load %arg5[%c0_8, %c0_9, %c0_10] : memref<1x32x32xf32, #tpu.memory_space<vmem>>, vector<1x32x32xf32>
    %7 = vector.shape_cast %6 : vector<1x32x32xf32> to vector<32x32xf32>
    %cst = arith.constant dense<0.000000e+00> : vector<8x32xf32>
    %8 = tpu.matmul %1, %7, %cst {dimension_numbers = #tpu.dot_dimension_numbers<[1], [0], [0], [1], [0, 0, 1, 1], [], []>} : vector<8x32xf32>, vector<32x32xf32>, vector<8x32xf32> -> vector<8x32xf32>
    %c0_11 = arith.constant 0 : index
    %c0_12 = arith.constant 0 : index
    %c0_13 = arith.constant 0 : index
    %9 = vector.load %arg6[%c0_11, %c0_12, %c0_13] : memref<1x1x32xf32, #tpu.memory_space<vmem>>, vector<1x1x32xf32>
    %10 = vector.shape_cast %9 : vector<1x1x32xf32> to vector<1x32xf32>
    %11 = vector.broadcast %10 : vector<1x32xf32> to vector<8x32xf32>
    %12 = arith.addf %8, %11 : vector<8x32xf32>
    %c0_14 = arith.constant 0 : index
    %c0_15 = arith.constant 0 : index
    %c0_16 = arith.constant 0 : index
    %13 = vector.load %arg7[%c0_14, %c0_15, %c0_16] : memref<1x32x32xf32, #tpu.memory_space<vmem>>, vector<1x32x32xf32>
    %14 = vector.shape_cast %13 : vector<1x32x32xf32> to vector<32x32xf32>
    %cst_17 = arith.constant dense<0.000000e+00> : vector<8x32xf32>
    %15 = tpu.matmul %3, %14, %cst_17 {dimension_numbers = #tpu.dot_dimension_numbers<[1], [0], [0], [1], [0, 0, 1, 1], [], []>} : vector<8x32xf32>, vector<32x32xf32>, vector<8x32xf32> -> vector<8x32xf32>
    %c0_18 = arith.constant 0 : index
    %c0_19 = arith.constant 0 : index
    %c0_20 = arith.constant 0 : index
    %16 = vector.load %arg8[%c0_18, %c0_19, %c0_20] : memref<1x1x32xf32, #tpu.memory_space<vmem>>, vector<1x1x32xf32>
    %17 = vector.shape_cast %16 : vector<1x1x32xf32> to vector<1x32xf32>
    %18 = vector.broadcast %17 : vector<1x32xf32> to vector<8x32xf32>
    %19 = arith.addf %15, %18 : vector<8x32xf32>
    %c0_21 = arith.constant 0 : index
    %c0_22 = arith.constant 0 : index
    %c0_23 = arith.constant 0 : index
    %20 = vector.load %arg9[%c0_21, %c0_22, %c0_23] : memref<1x32x32xf32, #tpu.memory_space<vmem>>, vector<1x32x32xf32>
    %21 = vector.shape_cast %20 : vector<1x32x32xf32> to vector<32x32xf32>
    %cst_24 = arith.constant dense<0.000000e+00> : vector<8x32xf32>
    %22 = tpu.matmul %5, %21, %cst_24 {dimension_numbers = #tpu.dot_dimension_numbers<[1], [0], [0], [1], [0, 0, 1, 1], [], []>} : vector<8x32xf32>, vector<32x32xf32>, vector<8x32xf32> -> vector<8x32xf32>
    %c0_25 = arith.constant 0 : index
    %c0_26 = arith.constant 0 : index
    %c0_27 = arith.constant 0 : index
    %23 = vector.load %arg10[%c0_25, %c0_26, %c0_27] : memref<1x1x32xf32, #tpu.memory_space<vmem>>, vector<1x1x32xf32>
    %24 = vector.shape_cast %23 : vector<1x1x32xf32> to vector<1x32xf32>
    %25 = vector.broadcast %24 : vector<1x32xf32> to vector<8x32xf32>
    %26 = arith.addf %22, %25 : vector<8x32xf32>
    %27 = vector.shape_cast %12 : vector<8x32xf32> to vector<1x8x32xf32>
    %28 = vector.shape_cast %19 : vector<8x32xf32> to vector<1x8x32xf32>
    %29 = vector.shape_cast %26 : vector<8x32xf32> to vector<1x8x32xf32>
    %30 = vector.extract_strided_slice %27 {offsets = [0, 0, 0], sizes = [1, 8, 8], strides = [1, 1, 1]} : vector<1x8x32xf32> to vector<1x8x8xf32>
    %31 = vector.extract_strided_slice %28 {offsets = [0, 0, 0], sizes = [1, 8, 8], strides = [1, 1, 1]} : vector<1x8x32xf32> to vector<1x8x8xf32>
    %32 = vector.extract_strided_slice %29 {offsets = [0, 0, 0], sizes = [1, 8, 8], strides = [1, 1, 1]} : vector<1x8x32xf32> to vector<1x8x8xf32>
    "tpu.trace_start"() <{level = 10 : i32, message = "bqd,bkd->bqk"}> : () -> ()
    %cst_28 = arith.constant dense<0.000000e+00> : vector<1x8x8xf32>
    %33 = tpu.matmul %30, %31, %cst_28 {dimension_numbers = #tpu.dot_dimension_numbers<[2], [2], [1], [1], [0, 0, 0, 1, 1, 1], [0], [0]>} : vector<1x8x8xf32>, vector<1x8x8xf32>, vector<1x8x8xf32> -> vector<1x8x8xf32>
    "tpu.trace_stop"() : () -> ()
    %cst_29 = arith.constant dense<0xFF800000> : vector<1x8xf32>
    %34 = vector.multi_reduction <maximumf>, %33, %cst_29 [2] : vector<1x8x8xf32> to vector<1x8xf32>
    %35 = vector.shape_cast %34 : vector<1x8xf32> to vector<1x8x1xf32>
    %36 = vector.broadcast %35 : vector<1x8x1xf32> to vector<1x8x8xf32>
    %37 = arith.subf %33, %36 : vector<1x8x8xf32>
    %38 = math.exp %37 : vector<1x8x8xf32>
    %cst_30 = arith.constant dense<0.000000e+00> : vector<1x8xf32>
    %39 = vector.multi_reduction <add>, %38, %cst_30 [2] : vector<1x8x8xf32> to vector<1x8xf32>
    %40 = vector.shape_cast %39 : vector<1x8xf32> to vector<1x8x1xf32>
    %41 = vector.broadcast %40 : vector<1x8x1xf32> to vector<1x8x8xf32>
    %42 = arith.divf %38, %41 : vector<1x8x8xf32>
    "tpu.trace_start"() <{level = 10 : i32, message = "bqk,bkd->bqd"}> : () -> ()
    %cst_31 = arith.constant dense<0.000000e+00> : vector<1x8x8xf32>
    %43 = tpu.matmul %42, %32, %cst_31 {dimension_numbers = #tpu.dot_dimension_numbers<[2], [1], [1], [2], [0, 0, 0, 1, 1, 2], [0], [0]>} : vector<1x8x8xf32>, vector<1x8x8xf32>, vector<1x8x8xf32> -> vector<1x8x8xf32>
    "tpu.trace_stop"() : () -> ()
    %44 = vector.shape_cast %43 : vector<1x8x8xf32> to vector<8x8xf32>
    %45 = arith.index_cast %arg1 : i32 to index
    %c0_32 = arith.constant 0 : index
    %c0_33 = arith.constant 0 : index
    %46 = vector.load %arg14[%45, %c0_32, %c0_33] : memref<1x8x32xf32, #tpu.memory_space<vmem>>, vector<1x8x8xf32>
    %47 = vector.shape_cast %46 : vector<1x8x8xf32> to vector<8x8xf32>
    %48 = vector.shape_cast %44 : vector<8x8xf32> to vector<1x8x8xf32>
    tpu.vector_store %arg14[%45, %c0_32, %c0_33], %48 {strides = array<i32>} : memref<1x8x32xf32, #tpu.memory_space<vmem>>, vector<1x8x8xf32>,
    %49 = vector.extract_strided_slice %27 {offsets = [0, 0, 8], sizes = [1, 8, 8], strides = [1, 1, 1]} : vector<1x8x32xf32> to vector<1x8x8xf32>
    %50 = vector.extract_strided_slice %28 {offsets = [0, 0, 8], sizes = [1, 8, 8], strides = [1, 1, 1]} : vector<1x8x32xf32> to vector<1x8x8xf32>
    %51 = vector.extract_strided_slice %29 {offsets = [0, 0, 8], sizes = [1, 8, 8], strides = [1, 1, 1]} : vector<1x8x32xf32> to vector<1x8x8xf32>
    "tpu.trace_start"() <{level = 10 : i32, message = "bqd,bkd->bqk"}> : () -> ()
    %cst_34 = arith.constant dense<0.000000e+00> : vector<1x8x8xf32>
    %52 = tpu.matmul %49, %50, %cst_34 {dimension_numbers = #tpu.dot_dimension_numbers<[2], [2], [1], [1], [0, 0, 0, 1, 1, 1], [0], [0]>} : vector<1x8x8xf32>, vector<1x8x8xf32>, vector<1x8x8xf32> -> vector<1x8x8xf32>
    "tpu.trace_stop"() : () -> ()
    %cst_35 = arith.constant dense<0xFF800000> : vector<1x8xf32>
    %53 = vector.multi_reduction <maximumf>, %52, %cst_35 [2] : vector<1x8x8xf32> to vector<1x8xf32>
    %54 = vector.shape_cast %53 : vector<1x8xf32> to vector<1x8x1xf32>
    %55 = vector.broadcast %54 : vector<1x8x1xf32> to vector<1x8x8xf32>
    %56 = arith.subf %52, %55 : vector<1x8x8xf32>
    %57 = math.exp %56 : vector<1x8x8xf32>
    %cst_36 = arith.constant dense<0.000000e+00> : vector<1x8xf32>
    %58 = vector.multi_reduction <add>, %57, %cst_36 [2] : vector<1x8x8xf32> to vector<1x8xf32>
    %59 = vector.shape_cast %58 : vector<1x8xf32> to vector<1x8x1xf32>
    %60 = vector.broadcast %59 : vector<1x8x1xf32> to vector<1x8x8xf32>
    %61 = arith.divf %57, %60 : vector<1x8x8xf32>
    "tpu.trace_start"() <{level = 10 : i32, message = "bqk,bkd->bqd"}> : () -> ()
    %cst_37 = arith.constant dense<0.000000e+00> : vector<1x8x8xf32>
    %62 = tpu.matmul %61, %51, %cst_37 {dimension_numbers = #tpu.dot_dimension_numbers<[2], [1], [1], [2], [0, 0, 0, 1, 1, 2], [0], [0]>} : vector<1x8x8xf32>, vector<1x8x8xf32>, vector<1x8x8xf32> -> vector<1x8x8xf32>
    "tpu.trace_stop"() : () -> ()
    %63 = vector.shape_cast %62 : vector<1x8x8xf32> to vector<8x8xf32>
    %64 = arith.index_cast %arg1 : i32 to index
    %c0_38 = arith.constant 0 : index
    %c8 = arith.constant 8 : index
    %65 = vector.load %arg14[%64, %c0_38, %c8] : memref<1x8x32xf32, #tpu.memory_space<vmem>>, vector<1x8x8xf32>
    %66 = vector.shape_cast %65 : vector<1x8x8xf32> to vector<8x8xf32>
    %67 = vector.shape_cast %63 : vector<8x8xf32> to vector<1x8x8xf32>
    tpu.vector_store %arg14[%64, %c0_38, %c8], %67 {strides = array<i32>} : memref<1x8x32xf32, #tpu.memory_space<vmem>>, vector<1x8x8xf32>,
    %68 = vector.extract_strided_slice %27 {offsets = [0, 0, 16], sizes = [1, 8, 8], strides = [1, 1, 1]} : vector<1x8x32xf32> to vector<1x8x8xf32>
    %69 = vector.extract_strided_slice %28 {offsets = [0, 0, 16], sizes = [1, 8, 8], strides = [1, 1, 1]} : vector<1x8x32xf32> to vector<1x8x8xf32>
    %70 = vector.extract_strided_slice %29 {offsets = [0, 0, 16], sizes = [1, 8, 8], strides = [1, 1, 1]} : vector<1x8x32xf32> to vector<1x8x8xf32>
    "tpu.trace_start"() <{level = 10 : i32, message = "bqd,bkd->bqk"}> : () -> ()
    %cst_39 = arith.constant dense<0.000000e+00> : vector<1x8x8xf32>
    %71 = tpu.matmul %68, %69, %cst_39 {dimension_numbers = #tpu.dot_dimension_numbers<[2], [2], [1], [1], [0, 0, 0, 1, 1, 1], [0], [0]>} : vector<1x8x8xf32>, vector<1x8x8xf32>, vector<1x8x8xf32> -> vector<1x8x8xf32>
    "tpu.trace_stop"() : () -> ()
    %cst_40 = arith.constant dense<0xFF800000> : vector<1x8xf32>
    %72 = vector.multi_reduction <maximumf>, %71, %cst_40 [2] : vector<1x8x8xf32> to vector<1x8xf32>
    %73 = vector.shape_cast %72 : vector<1x8xf32> to vector<1x8x1xf32>
    %74 = vector.broadcast %73 : vector<1x8x1xf32> to vector<1x8x8xf32>
    %75 = arith.subf %71, %74 : vector<1x8x8xf32>
    %76 = math.exp %75 : vector<1x8x8xf32>
    %cst_41 = arith.constant dense<0.000000e+00> : vector<1x8xf32>
    %77 = vector.multi_reduction <add>, %76, %cst_41 [2] : vector<1x8x8xf32> to vector<1x8xf32>
    %78 = vector.shape_cast %77 : vector<1x8xf32> to vector<1x8x1xf32>
    %79 = vector.broadcast %78 : vector<1x8x1xf32> to vector<1x8x8xf32>
    %80 = arith.divf %76, %79 : vector<1x8x8xf32>
    "tpu.trace_start"() <{level = 10 : i32, message = "bqk,bkd->bqd"}> : () -> ()
    %cst_42 = arith.constant dense<0.000000e+00> : vector<1x8x8xf32>
    %81 = tpu.matmul %80, %70, %cst_42 {dimension_numbers = #tpu.dot_dimension_numbers<[2], [1], [1], [2], [0, 0, 0, 1, 1, 2], [0], [0]>} : vector<1x8x8xf32>, vector<1x8x8xf32>, vector<1x8x8xf32> -> vector<1x8x8xf32>
    "tpu.trace_stop"() : () -> ()
    %82 = vector.shape_cast %81 : vector<1x8x8xf32> to vector<8x8xf32>
    %83 = arith.index_cast %arg1 : i32 to index
    %c0_43 = arith.constant 0 : index
    %c16 = arith.constant 16 : index
    %84 = vector.load %arg14[%83, %c0_43, %c16] : memref<1x8x32xf32, #tpu.memory_space<vmem>>, vector<1x8x8xf32>
    %85 = vector.shape_cast %84 : vector<1x8x8xf32> to vector<8x8xf32>
    %86 = vector.shape_cast %82 : vector<8x8xf32> to vector<1x8x8xf32>
    tpu.vector_store %arg14[%83, %c0_43, %c16], %86 {strides = array<i32>} : memref<1x8x32xf32, #tpu.memory_space<vmem>>, vector<1x8x8xf32>,
    %87 = vector.extract_strided_slice %27 {offsets = [0, 0, 24], sizes = [1, 8, 8], strides = [1, 1, 1]} : vector<1x8x32xf32> to vector<1x8x8xf32>
    %88 = vector.extract_strided_slice %28 {offsets = [0, 0, 24], sizes = [1, 8, 8], strides = [1, 1, 1]} : vector<1x8x32xf32> to vector<1x8x8xf32>
    %89 = vector.extract_strided_slice %29 {offsets = [0, 0, 24], sizes = [1, 8, 8], strides = [1, 1, 1]} : vector<1x8x32xf32> to vector<1x8x8xf32>
    "tpu.trace_start"() <{level = 10 : i32, message = "bqd,bkd->bqk"}> : () -> ()
    %cst_44 = arith.constant dense<0.000000e+00> : vector<1x8x8xf32>
    %90 = tpu.matmul %87, %88, %cst_44 {dimension_numbers = #tpu.dot_dimension_numbers<[2], [2], [1], [1], [0, 0, 0, 1, 1, 1], [0], [0]>} : vector<1x8x8xf32>, vector<1x8x8xf32>, vector<1x8x8xf32> -> vector<1x8x8xf32>
    "tpu.trace_stop"() : () -> ()
    %cst_45 = arith.constant dense<0xFF800000> : vector<1x8xf32>
    %91 = vector.multi_reduction <maximumf>, %90, %cst_45 [2] : vector<1x8x8xf32> to vector<1x8xf32>
    %92 = vector.shape_cast %91 : vector<1x8xf32> to vector<1x8x1xf32>
    %93 = vector.broadcast %92 : vector<1x8x1xf32> to vector<1x8x8xf32>
    %94 = arith.subf %90, %93 : vector<1x8x8xf32>
    %95 = math.exp %94 : vector<1x8x8xf32>
    %cst_46 = arith.constant dense<0.000000e+00> : vector<1x8xf32>
    %96 = vector.multi_reduction <add>, %95, %cst_46 [2] : vector<1x8x8xf32> to vector<1x8xf32>
    %97 = vector.shape_cast %96 : vector<1x8xf32> to vector<1x8x1xf32>
    %98 = vector.broadcast %97 : vector<1x8x1xf32> to vector<1x8x8xf32>
    %99 = arith.divf %95, %98 : vector<1x8x8xf32>
    "tpu.trace_start"() <{level = 10 : i32, message = "bqk,bkd->bqd"}> : () -> ()
    %cst_47 = arith.constant dense<0.000000e+00> : vector<1x8x8xf32>
    %100 = tpu.matmul %99, %89, %cst_47 {dimension_numbers = #tpu.dot_dimension_numbers<[2], [1], [1], [2], [0, 0, 0, 1, 1, 2], [0], [0]>} : vector<1x8x8xf32>, vector<1x8x8xf32>, vector<1x8x8xf32> -> vector<1x8x8xf32>
    "tpu.trace_stop"() : () -> ()
    %101 = vector.shape_cast %100 : vector<1x8x8xf32> to vector<8x8xf32>
    %102 = arith.index_cast %arg1 : i32 to index
    %c0_48 = arith.constant 0 : index
    %c24 = arith.constant 24 : index
    %103 = vector.load %arg14[%102, %c0_48, %c24] : memref<1x8x32xf32, #tpu.memory_space<vmem>>, vector<1x8x8xf32>
    %104 = vector.shape_cast %103 : vector<1x8x8xf32> to vector<8x8xf32>
    %105 = vector.shape_cast %101 : vector<8x8xf32> to vector<1x8x8xf32>
    tpu.vector_store %arg14[%102, %c0_48, %c24], %105 {strides = array<i32>} : memref<1x8x32xf32, #tpu.memory_space<vmem>>, vector<1x8x8xf32>,
    %c0_i32 = arith.constant 0 : i32
    %106 = arith.cmpi eq, %arg1, %c0_i32 : i32
    %107 = arith.extui %106 : i1 to i32
    %c0_i32_49 = arith.constant 0 : i32
    %108 = arith.cmpi ne, %107, %c0_i32_49 : i32
    scf.if %108 {
      %c0_50 = arith.constant 0 : index
      %c0_51 = arith.constant 0 : index
      %c0_52 = arith.constant 0 : index
      %109 = vector.load %arg14[%c0_50, %c0_51, %c0_52] : memref<1x8x32xf32, #tpu.memory_space<vmem>>, vector<1x8x32xf32>
      %110 = vector.shape_cast %109 : vector<1x8x32xf32> to vector<8x32xf32>
      %c0_53 = arith.constant 0 : index
      %c0_54 = arith.constant 0 : index
      %c0_55 = arith.constant 0 : index
      %111 = vector.load %arg11[%c0_53, %c0_54, %c0_55] : memref<1x32x32xf32, #tpu.memory_space<vmem>>, vector<1x32x32xf32>
      %112 = vector.shape_cast %111 : vector<1x32x32xf32> to vector<32x32xf32>
      %cst_56 = arith.constant dense<0.000000e+00> : vector<8x32xf32>
      %113 = tpu.matmul %110, %112, %cst_56 {dimension_numbers = #tpu.dot_dimension_numbers<[1], [0], [0], [1], [0, 0, 1, 1], [], []>} : vector<8x32xf32>, vector<32x32xf32>, vector<8x32xf32> -> vector<8x32xf32>
      %c0_57 = arith.constant 0 : index
      %c0_58 = arith.constant 0 : index
      %114 = vector.load %arg12[%c0_57, %c0_58] : memref<1x32xf32, #tpu.memory_space<vmem>>, vector<1x32xf32>
      %115 = vector.broadcast %114 : vector<1x32xf32> to vector<8x32xf32>
      %116 = arith.addf %113, %115 : vector<8x32xf32>
      %117 = vector.shape_cast %116 : vector<8x32xf32> to vector<1x8x32xf32>
      %c0_59 = arith.constant 0 : index
      %c0_60 = arith.constant 0 : index
      %c0_61 = arith.constant 0 : index
      %118 = vector.load %arg13[%c0_59, %c0_60, %c0_61] : memref<1x8x32xf32, #tpu.memory_space<vmem>>, vector<1x8x32xf32>
      tpu.vector_store %arg13[%c0_59, %c0_60, %c0_61], %117 {strides = array<i32>} : memref<1x8x32xf32, #tpu.memory_space<vmem>>, vector<1x8x32xf32>,
    } else {
    }
    return
  }
  func.func @transform_0(%arg0: i32, %arg1: i32) -> (i32, i32, i32) {
    %c0_i32 = arith.constant 0 : i32
    %c0_i32_0 = arith.constant 0 : i32
    %c0_i32_1 = arith.constant 0 : i32
    return %arg0, %c0_i32, %c0_i32_0 : i32, i32, i32
  }
  func.func @transform_1(%arg0: i32, %arg1: i32) -> (i32, i32, i32) {
    %c0_i32 = arith.constant 0 : i32
    %c0_i32_0 = arith.constant 0 : i32
    %c0_i32_1 = arith.constant 0 : i32
    return %arg0, %c0_i32, %c0_i32_0 : i32, i32, i32
  }
  func.func @transform_2(%arg0: i32, %arg1: i32) -> (i32, i32, i32) {
    %c0_i32 = arith.constant 0 : i32
    %c0_i32_0 = arith.constant 0 : i32
    %c0_i32_1 = arith.constant 0 : i32
    return %arg0, %c0_i32, %c0_i32_0 : i32, i32, i32
  }
  func.func @transform_3(%arg0: i32, %arg1: i32) -> (i32, i32, i32) {
    %c0_i32 = arith.constant 0 : i32
    %c0_i32_0 = arith.constant 0 : i32
    %c0_i32_1 = arith.constant 0 : i32
    return %arg1, %c0_i32, %c0_i32_0 : i32, i32, i32
  }
  func.func @transform_4(%arg0: i32, %arg1: i32) -> (i32, i32, i32) {
    %c0_i32 = arith.constant 0 : i32
    %c0_i32_0 = arith.constant 0 : i32
    %c0_i32_1 = arith.constant 0 : i32
    return %arg1, %c0_i32, %c0_i32_0 : i32, i32, i32
  }
  func.func @transform_5(%arg0: i32, %arg1: i32) -> (i32, i32, i32) {
    %c0_i32 = arith.constant 0 : i32
    %c0_i32_0 = arith.constant 0 : i32
    %c0_i32_1 = arith.constant 0 : i32
    return %arg1, %c0_i32, %c0_i32_0 : i32, i32, i32
  }
  func.func @transform_6(%arg0: i32, %arg1: i32) -> (i32, i32, i32) {
    %c0_i32 = arith.constant 0 : i32
    %c0_i32_0 = arith.constant 0 : i32
    %c0_i32_1 = arith.constant 0 : i32
    return %arg1, %c0_i32, %c0_i32_0 : i32, i32, i32
  }
  func.func @transform_7(%arg0: i32, %arg1: i32) -> (i32, i32, i32) {
    %c0_i32 = arith.constant 0 : i32
    %c0_i32_0 = arith.constant 0 : i32
    %c0_i32_1 = arith.constant 0 : i32
    return %arg1, %c0_i32, %c0_i32_0 : i32, i32, i32
  }
  func.func @transform_8(%arg0: i32, %arg1: i32) -> (i32, i32, i32) {
    %c0_i32 = arith.constant 0 : i32
    %c0_i32_0 = arith.constant 0 : i32
    %c0_i32_1 = arith.constant 0 : i32
    return %arg1, %c0_i32, %c0_i32_0 : i32, i32, i32
  }
  func.func @transform_9(%arg0: i32, %arg1: i32) -> (i32, i32, i32) {
    %c0_i32 = arith.constant 0 : i32
    %c0_i32_0 = arith.constant 0 : i32
    %c0_i32_1 = arith.constant 0 : i32
    %c0_i32_2 = arith.constant 0 : i32
    return %c0_i32, %c0_i32_0, %c0_i32_1 : i32, i32, i32
  }
  func.func @transform_10(%arg0: i32, %arg1: i32) -> (i32, i32) {
    %c0_i32 = arith.constant 0 : i32
    %c0_i32_0 = arith.constant 0 : i32
    %c0_i32_1 = arith.constant 0 : i32
    return %c0_i32, %c0_i32_0 : i32, i32
  }
  func.func @transform_11(%arg0: i32, %arg1: i32) -> (i32, i32, i32) {
    %c0_i32 = arith.constant 0 : i32
    %c0_i32_0 = arith.constant 0 : i32
    %c0_i32_1 = arith.constant 0 : i32
    return %arg0, %c0_i32, %c0_i32_0 : i32, i32, i32
  }
}

</mosaic_0001>

<llo_original>
// kernel: tpu_custom_call.1
$region0: #{tpu_custom_call.1}
  #allocation0 [shape = 'u32[]', space=smem, size = 0x4, offset = 0x4, fixed_abs, tag = 'smem constant byte address 0x4 - core index']
  #allocation1 [shape = 'u32[144,128]{1,0:T(1,128)}', space=vmem, size = 0x12000, scoped, tag = 'internal scratch']
  #allocation2 [shape = 'f32[1,8,32]{2,1,0:T(8,128)}', space=vmem, size = 0x1000, scoped, tag = 'scratch operand']
  %s0 = inlined_call_operand.hbm [shape: f32[2,8,32], index: 0, kind: input, shape index: {}]
  %s1 = inlined_call_operand.hbm [shape: f32[2,8,32], index: 1, kind: input, shape index: {}]
  %s2 = inlined_call_operand.hbm [shape: f32[2,8,32], index: 2, kind: input, shape index: {}]
  %s3 = inlined_call_operand.hbm [shape: f32[1,32,32], index: 3, kind: input, shape index: {}]
  %s4 = inlined_call_operand.vmem [shape: f32[1,1,32], index: 4, kind: input, shape index: {}]
  %s5 = inlined_call_operand.hbm [shape: f32[1,32,32], index: 5, kind: input, shape index: {}]
  %s6 = inlined_call_operand.vmem [shape: f32[1,1,32], index: 6, kind: input, shape index: {}]
  %s7 = inlined_call_operand.hbm [shape: f32[1,32,32], index: 7, kind: input, shape index: {}]
  %s8 = inlined_call_operand.hbm [shape: f32[1,1,32], index: 8, kind: input, shape index: {}]
  %s9 = inlined_call_operand.vmem [shape: f32[1,32,32], index: 9, kind: input, shape index: {}]
  %s10 = inlined_call_operand.vmem [shape: f32[1,32], index: 10, kind: input, shape index: {}]
  %s11 = inlined_call_operand.hbm [shape: f32[2,8,32], index: 11, kind: output, shape index: {}]
  %s12 = sld [smem:[#allocation0]]
  $region109: #{tpu_custom_call.1} parent=0
    _
  %s14 = ssub.s32 1, %s12
  %s15 = scalar_select 0, %s14, %s12
  $region1: #{tpu_custom_call.1} parent=0
    #allocation3 [shape = 'u8[8192]{0}', space=vmem, size = 0x2000, scoped, tag = 'input window, operand 0']
    #allocation4 [shape = 's32[2]{0}', space=sflag, size = 0x8, scoped, tag = 'scoped memory for tpu_custom_call.1']
    #allocation5 [shape = 's32[2]{0}', space=sflag, size = 0x8, scoped, tag = 'scoped memory for tpu_custom_call.1']
    #allocation6 [shape = 'u8[8192]{0}', space=vmem, size = 0x2000, scoped, tag = 'input window, operand 1']
    #allocation7 [shape = 's32[2]{0}', space=sflag, size = 0x8, scoped, tag = 'scoped memory for tpu_custom_call.1']
    #allocation8 [shape = 'u8[8192]{0}', space=vmem, size = 0x2000, scoped, tag = 'input window, operand 2']
    #allocation9 [shape = 'u8[16384]{0}', space=vmem, size = 0x4000, scoped, tag = 'input window, operand 3, single buffered']
    #allocation10 [shape = 's32[1]{0}', space=sflag, size = 0x4, scoped, tag = 'scoped memory for tpu_custom_call.1']
    #allocation11 [shape = 'u8[16384]{0}', space=vmem, size = 0x4000, scoped, tag = 'input window, operand 5, single buffered']
    #allocation12 [shape = 'u8[16384]{0}', space=vmem, size = 0x4000, scoped, tag = 'input window, operand 7, single buffered']
    #allocation13 [shape = 's32[1]{0}', space=sflag, size = 0x4, scoped, tag = 'scoped memory for tpu_custom_call.1']
    #allocation14 [shape = 'u8[512]{0}', space=vmem, size = 0x400, scoped, tag = 'input window, operand 8, single buffered']
    #allocation15 [shape = 'u8[8192]{0}', space=vmem, size = 0x2000, scoped, tag = 'output window, operand 0']
    %16 = vsyncpa [#allocation4], 0
    %s17 = scalar_lea.sflag [#allocation4], 1
    %18 = vsyncpa %s17, 0
    %19 = vsyncpa [#allocation7], 0
    %s20 = scalar_lea.sflag [#allocation7], 1
    %21 = vsyncpa %s20, 0
    %22 = vsyncpa [#allocation10], 0
    %23 = vsyncpa [#allocation13], 0
    %24 = vsyncpa [#allocation5], 0
    %s25 = scalar_lea.sflag [#allocation5], 1
    %26 = vsyncpa %s25, 0
    loop: start=0, step=1, limit=4
    $region2: #{tpu_custom_call.1} parent=1 // loop_pre_header
      _
    $region3: #{tpu_custom_call.1} parent=1 // loop_header
      %s28 = sphi 0, %s32
      %p29 = scmp.ge.s32.totalorder %s28, 4
      %s35 = sphi 0, %s47
      %s36 = sphi 0, %s43
      %s37 = sphi 0, %s35
      %s38 = sphi 0, %s36
      %s39 = sphi 0, %s37
      %s40 = sphi 0, %s38
      %s50 = sphi 0, %s52
      %s53 = sphi 0, %s50
      %s54 = sphi 0, %s53
      %s70 = sphi 0, %s54
      %s76 = sphi 0, %s78
      %s79 = sphi 0, %s76
      %s80 = sphi 0, %s79
      %s96 = sphi 0, %s80
      %s102 = sphi 0, %s104
      %s105 = sphi 0, %s102
      %s106 = sphi 0, %s105
      %s122 = sphi 0, %s106
      %s128 = sphi 0, %s130
      %s131 = sphi 0, %s128
      %s132 = sphi 0, %s131
      %s148 = sphi 0, %s132
      %s154 = sphi 0, %s156
      %s157 = sphi 0, %s154
      %s158 = sphi 0, %s157
      %s174 = sphi 0, %s158
      %s180 = sphi 0, %s182
      %s183 = sphi 0, %s180
      %s184 = sphi 0, %s183
      %s200 = sphi 0, %s184
      %s206 = sphi 0, %s208
      %s209 = sphi 0, %s206
      %s210 = sphi 0, %s209
      %s226 = sphi 0, %s210
      %s232 = sphi 0, %s234
      %s235 = sphi 0, %s232
      %s236 = sphi 0, %s235
      %s252 = sphi 0, %s236
      %s258 = sphi 0, %s260
      %s261 = sphi 0, %s258
      %s262 = sphi 0, %s261
      %s278 = sphi 0, %s262
      %s282 = sphi 0, %s282
      %s284 = sphi 0, %s282
      %s285 = sphi 0, %s284
      %s299 = sphi 0, %s285
      %s303 = sphi 0, %s303
      %s305 = sphi 0, %s303
      %s306 = sphi 0, %s305
      %s320 = sphi 0, %s306
      %s326 = sphi 0, %s328
      %s329 = sphi 0, %s326
      %s330 = sphi 0, %s329
      %s346 = sphi 0, %s330
    $region4: #{tpu_custom_call.1} parent=1 // loop_header_branch
      %31 = sbr.rel (%p29) target = $region8
    $region5: #{tpu_custom_call.1} parent=1 // loop_body
      %s33 = ssub.s32 %s28, 1
      %s34 = ssub.s32 %s28, 2
      %s41 = sadd.s32 1, %s36
      %p42 = scmp.ge.s32.totalorder %s41, 1
      %s43 = scalar_select %p42, 0, %s41
      %s44 = sadd.s32 1, %s35
      %s45 = scalar_select %p42, %s44, %s35
      %p46 = scmp.ge.s32.totalorder %s45, 2
      %s47 = scalar_select %p46, 0, %s45
      %s48 = ssub.s32 %s35, %s47
      %p49 = scmp.eq.s32.totalorder %s48, 0
      %s51 = sadd.s32 %s50, 1
      %s52 = scalar_select %p49, %s50, %s51
      %p55 = pneg %p49
      %p56 = scmp.eq.s32.totalorder %s28, 1
      %p57 = por %p55, %p56
      %p58 = scmp.ne.s32.totalorder %s50, %s53
      %p59 = scmp.eq.s32.totalorder %s28, 0
      %p60 = por %p58, %p59
      %p61 = scmp.ne.s32.totalorder %s50, %s53
      %p62 = scmp.eq.s32.totalorder %s33, 1
      %p63 = por %p61, %p62
      %p64 = scmp.ne.s32.totalorder %s53, %s54
      %p65 = scmp.eq.s32.totalorder %s33, 0
      %p66 = por %p64, %p65
      %p67 = scmp.ne.s32.totalorder %s53, %s54
      %p68 = scmp.eq.s32.totalorder %s34, 1
      %p69 = por %p67, %p68
      %p71 = scmp.ne.s32.totalorder %s54, %s70
      %p72 = scmp.eq.s32.totalorder %s34, 0
      %p73 = por %p71, %p72
      %s74 = ssub.s32 %s35, %s47
      %p75 = scmp.eq.s32.totalorder %s74, 0
      %s77 = sadd.s32 %s76, 1
      %s78 = scalar_select %p75, %s76, %s77
      %p81 = pneg %p75
      %p82 = scmp.eq.s32.totalorder %s28, 1
      %p83 = por %p81, %p82
      %p84 = scmp.ne.s32.totalorder %s76, %s79
      %p85 = scmp.eq.s32.totalorder %s28, 0
      %p86 = por %p84, %p85
      %p87 = scmp.ne.s32.totalorder %s76, %s79
      %p88 = scmp.eq.s32.totalorder %s33, 1
      %p89 = por %p87, %p88
      %p90 = scmp.ne.s32.totalorder %s79, %s80
      %p91 = scmp.eq.s32.totalorder %s33, 0
      %p92 = por %p90, %p91
      %p93 = scmp.ne.s32.totalorder %s79, %s80
      %p94 = scmp.eq.s32.totalorder %s34, 1
      %p95 = por %p93, %p94
      %p97 = scmp.ne.s32.totalorder %s80, %s96
      %p98 = scmp.eq.s32.totalorder %s34, 0
      %p99 = por %p97, %p98
      %s100 = ssub.s32 %s35, %s47
      %p101 = scmp.eq.s32.totalorder %s100, 0
      %s103 = sadd.s32 %s102, 1
      %s104 = scalar_select %p101, %s102, %s103
      %p107 = pneg %p101
      %p108 = scmp.eq.s32.totalorder %s28, 1
      %p109 = por %p107, %p108
      %p110 = scmp.ne.s32.totalorder %s102, %s105
      %p111 = scmp.eq.s32.totalorder %s28, 0
      %p112 = por %p110, %p111
      %p113 = scmp.ne.s32.totalorder %s102, %s105
      %p114 = scmp.eq.s32.totalorder %s33, 1
      %p115 = por %p113, %p114
      %p116 = scmp.ne.s32.totalorder %s105, %s106
      %p117 = scmp.eq.s32.totalorder %s33, 0
      %p118 = por %p116, %p117
      %p119 = scmp.ne.s32.totalorder %s105, %s106
      %p120 = scmp.eq.s32.totalorder %s34, 1
      %p121 = por %p119, %p120
      %p123 = scmp.ne.s32.totalorder %s106, %s122
      %p124 = scmp.eq.s32.totalorder %s34, 0
      %p125 = por %p123, %p124
      %s126 = ssub.s32 %s36, %s43
      %p127 = scmp.eq.s32.totalorder %s126, 0
      %s129 = sadd.s32 %s128, 1
      %s130 = scalar_select %p127, %s128, %s129
      %p133 = pneg %p127
      %p134 = scmp.eq.s32.totalorder %s28, 1
      %p135 = por %p133, %p134
      %p136 = scmp.ne.s32.totalorder %s128, %s131
      %p137 = scmp.eq.s32.totalorder %s28, 0
      %p138 = por %p136, %p137
      %p139 = scmp.ne.s32.totalorder %s128, %s131
      %p140 = scmp.eq.s32.totalorder %s33, 1
      %p141 = por %p139, %p140
      %p142 = scmp.ne.s32.totalorder %s131, %s132
      %p143 = scmp.eq.s32.totalorder %s33, 0
      %p144 = por %p142, %p143
      %p145 = scmp.ne.s32.totalorder %s131, %s132
      %p146 = scmp.eq.s32.totalorder %s34, 1
      %p147 = por %p145, %p146
      %p149 = scmp.ne.s32.totalorder %s132, %s148
      %p150 = scmp.eq.s32.totalorder %s34, 0
      %p151 = por %p149, %p150
      %s152 = ssub.s32 %s36, %s43
      %p153 = scmp.eq.s32.totalorder %s152, 0
      %s155 = sadd.s32 %s154, 1
      %s156 = scalar_select %p153, %s154, %s155
      %p159 = pneg %p153
      %p160 = scmp.eq.s32.totalorder %s28, 1
      %p161 = por %p159, %p160
      %p162 = scmp.ne.s32.totalorder %s154, %s157
      %p163 = scmp.eq.s32.totalorder %s28, 0
      %p164 = por %p162, %p163
      %p165 = scmp.ne.s32.totalorder %s154, %s157
      %p166 = scmp.eq.s32.totalorder %s33, 1
      %p167 = por %p165, %p166
      %p168 = scmp.ne.s32.totalorder %s157, %s158
      %p169 = scmp.eq.s32.totalorder %s33, 0
      %p170 = por %p168, %p169
      %p171 = scmp.ne.s32.totalorder %s157, %s158
      %p172 = scmp.eq.s32.totalorder %s34, 1
      %p173 = por %p171, %p172
      %p175 = scmp.ne.s32.totalorder %s158, %s174
      %p176 = scmp.eq.s32.totalorder %s34, 0
      %p177 = por %p175, %p176
      %s178 = ssub.s32 %s36, %s43
      %p179 = scmp.eq.s32.totalorder %s178, 0
      %s181 = sadd.s32 %s180, 1
      %s182 = scalar_select %p179, %s180, %s181
      %p185 = pneg %p179
      %p186 = scmp.eq.s32.totalorder %s28, 1
      %p187 = por %p185, %p186
      %p188 = scmp.ne.s32.totalorder %s180, %s183
      %p189 = scmp.eq.s32.totalorder %s28, 0
      %p190 = por %p188, %p189
      %p191 = scmp.ne.s32.totalorder %s180, %s183
      %p192 = scmp.eq.s32.totalorder %s33, 1
      %p193 = por %p191, %p192
      %p194 = scmp.ne.s32.totalorder %s183, %s184
      %p195 = scmp.eq.s32.totalorder %s33, 0
      %p196 = por %p194, %p195
      %p197 = scmp.ne.s32.totalorder %s183, %s184
      %p198 = scmp.eq.s32.totalorder %s34, 1
      %p199 = por %p197, %p198
      %p201 = scmp.ne.s32.totalorder %s184, %s200
      %p202 = scmp.eq.s32.totalorder %s34, 0
      %p203 = por %p201, %p202
      %s204 = ssub.s32 %s36, %s43
      %p205 = scmp.eq.s32.totalorder %s204, 0
      %s207 = sadd.s32 %s206, 1
      %s208 = scalar_select %p205, %s206, %s207
      %p211 = pneg %p205
      %p212 = scmp.eq.s32.totalorder %s28, 1
      %p213 = por %p211, %p212
      %p214 = scmp.ne.s32.totalorder %s206, %s209
      %p215 = scmp.eq.s32.totalorder %s28, 0
      %p216 = por %p214, %p215
      %p217 = scmp.ne.s32.totalorder %s206, %s209
      %p218 = scmp.eq.s32.totalorder %s33, 1
      %p219 = por %p217, %p218
      %p220 = scmp.ne.s32.totalorder %s209, %s210
      %p221 = scmp.eq.s32.totalorder %s33, 0
      %p222 = por %p220, %p221
      %p223 = scmp.ne.s32.totalorder %s209, %s210
      %p224 = scmp.eq.s32.totalorder %s34, 1
      %p225 = por %p223, %p224
      %p227 = scmp.ne.s32.totalorder %s210, %s226
      %p228 = scmp.eq.s32.totalorder %s34, 0
      %p229 = por %p227, %p228
      %s230 = ssub.s32 %s36, %s43
      %p231 = scmp.eq.s32.totalorder %s230, 0
      %s233 = sadd.s32 %s232, 1
      %s234 = scalar_select %p231, %s232, %s233
      %p237 = pneg %p231
      %p238 = scmp.eq.s32.totalorder %s28, 1
      %p239 = por %p237, %p238
      %p240 = scmp.ne.s32.totalorder %s232, %s235
      %p241 = scmp.eq.s32.totalorder %s28, 0
      %p242 = por %p240, %p241
      %p243 = scmp.ne.s32.totalorder %s232, %s235
      %p244 = scmp.eq.s32.totalorder %s33, 1
      %p245 = por %p243, %p244
      %p246 = scmp.ne.s32.totalorder %s235, %s236
      %p247 = scmp.eq.s32.totalorder %s33, 0
      %p248 = por %p246, %p247
      %p249 = scmp.ne.s32.totalorder %s235, %s236
      %p250 = scmp.eq.s32.totalorder %s34, 1
      %p251 = por %p249, %p250
      %p253 = scmp.ne.s32.totalorder %s236, %s252
      %p254 = scmp.eq.s32.totalorder %s34, 0
      %p255 = por %p253, %p254
      %s256 = ssub.s32 %s36, %s43
      %p257 = scmp.eq.s32.totalorder %s256, 0
      %s259 = sadd.s32 %s258, 1
      %s260 = scalar_select %p257, %s258, %s259
      %p263 = pneg %p257
      %p264 = scmp.eq.s32.totalorder %s28, 1
      %p265 = por %p263, %p264
      %p266 = scmp.ne.s32.totalorder %s258, %s261
      %p267 = scmp.eq.s32.totalorder %s28, 0
      %p268 = por %p266, %p267
      %p269 = scmp.ne.s32.totalorder %s258, %s261
      %p270 = scmp.eq.s32.totalorder %s33, 1
      %p271 = por %p269, %p270
      %p272 = scmp.ne.s32.totalorder %s261, %s262
      %p273 = scmp.eq.s32.totalorder %s33, 0
      %p274 = por %p272, %p273
      %p275 = scmp.ne.s32.totalorder %s261, %s262
      %p276 = scmp.eq.s32.totalorder %s34, 1
      %p277 = por %p275, %p276
      %p279 = scmp.ne.s32.totalorder %s262, %s278
      %p280 = scmp.eq.s32.totalorder %s34, 0
      %p281 = por %p279, %p280
      %s283 = sadd.s32 %s282, 1
      %p286 = scmp.eq.s32.totalorder %s28, 1
      %p287 = scmp.ne.s32.totalorder %s282, %s284
      %p288 = scmp.eq.s32.totalorder %s28, 0
      %p289 = por %p287, %p288
      %p290 = scmp.ne.s32.totalorder %s282, %s284
      %p291 = scmp.eq.s32.totalorder %s33, 1
      %p292 = por %p290, %p291
      %p293 = scmp.ne.s32.totalorder %s284, %s285
      %p294 = scmp.eq.s32.totalorder %s33, 0
      %p295 = por %p293, %p294
      %p296 = scmp.ne.s32.totalorder %s284, %s285
      %p297 = scmp.eq.s32.totalorder %s34, 1
      %p298 = por %p296, %p297
      %p300 = scmp.ne.s32.totalorder %s285, %s299
      %p301 = scmp.eq.s32.totalorder %s34, 0
      %p302 = por %p300, %p301
      %s304 = sadd.s32 %s303, 1
      %p307 = scmp.eq.s32.totalorder %s28, 1
      %p308 = scmp.ne.s32.totalorder %s303, %s305
      %p309 = scmp.eq.s32.totalorder %s28, 0
      %p310 = por %p308, %p309
      %p311 = scmp.ne.s32.totalorder %s303, %s305
      %p312 = scmp.eq.s32.totalorder %s33, 1
      %p313 = por %p311, %p312
      %p314 = scmp.ne.s32.totalorder %s305, %s306
      %p315 = scmp.eq.s32.totalorder %s33, 0
      %p316 = por %p314, %p315
      %p317 = scmp.ne.s32.totalorder %s305, %s306
      %p318 = scmp.eq.s32.totalorder %s34, 1
      %p319 = por %p317, %p318
      %p321 = scmp.ne.s32.totalorder %s306, %s320
      %p322 = scmp.eq.s32.totalorder %s34, 0
      %p323 = por %p321, %p322
      %s324 = ssub.s32 %s35, %s47
      %p325 = scmp.eq.s32.totalorder %s324, 0
      %s327 = sadd.s32 %s326, 1
      %s328 = scalar_select %p325, %s326, %s327
      %p331 = pneg %p325
      %p332 = scmp.eq.s32.totalorder %s28, 1
      %p333 = por %p331, %p332
      %p334 = scmp.ne.s32.totalorder %s326, %s329
      %p335 = scmp.eq.s32.totalorder %s28, 0
      %p336 = por %p334, %p335
      %p337 = scmp.ne.s32.totalorder %s326, %s329
      %p338 = scmp.eq.s32.totalorder %s33, 1
      %p339 = por %p337, %p338
      %p340 = scmp.ne.s32.totalorder %s329, %s330
      %p341 = scmp.eq.s32.totalorder %s33, 0
      %p342 = por %p340, %p341
      %p343 = scmp.ne.s32.totalorder %s329, %s330
      %p344 = scmp.eq.s32.totalorder %s34, 1
      %p345 = por %p343, %p344
      %p347 = scmp.ne.s32.totalorder %s330, %s346
      %p348 = scmp.eq.s32.totalorder %s34, 0
      %p349 = por %p347, %p348
      %p350 = scmp.le.s32.totalorder 1, %s28
      %p351 = scmp.lt.s32.totalorder %s28, 3
      %p352 = pnand %p350, %p351
      %p353 = pneg %p352
      // Predicated region
      $region9: #{tpu_custom_call.1} parent=5 // pred_check
        _
      $region10: #{tpu_custom_call.1} parent=5 // pred_check_branch
        %355 = sbr.rel (%p352) target = $region12
      $region11: #{tpu_custom_call.1} parent=5 // pred_region
        %s356 = ssub.s32 %s28, 1
        // Predicated region
        $region13: #{tpu_custom_call.1} parent=11 // pred_check
          %p357 = pneg %p144
        $region14: #{tpu_custom_call.1} parent=11 // pred_check_branch
          %359 = sbr.rel (%p357) target = $region16
        $region15: #{tpu_custom_call.1} parent=11 // pred_region
          %s361 = ssub.s32 512, 512
          %362 = vsyncadd [#allocation10], %s361
          %s363 = smul.addr %s38, 4
          %s364 = smul.addr %s363, 128
          %s365 = scalar_lea.hbm %s3, %s364
          %s366 = sshll.u32 [#allocation9], 4
          %s367 = int_to_ptr.vmem [resolvable:$true] %s366
          %372 = dma.hbm_to_vmem [thread:$0]  %s365, 512, %s367, [#allocation10], 128, 128, 8
        $region16: #{tpu_custom_call.1} parent=11 // pred_fallthru
          _
        // Predicated region
        $region17: #{tpu_custom_call.1} parent=11 // pred_check
          %p373 = pneg %p170
        $region18: #{tpu_custom_call.1} parent=11 // pred_check_branch
          %375 = sbr.rel (%p373) target = $region20
        $region19: #{tpu_custom_call.1} parent=11 // pred_region
          %p376 = scmp.lt.s32.totalorder %s38, 0
          %s377 = scalar_select %p376, %s38, 0
          %s378 = scalar_lea.vmem %s4, %s377
        $region20: #{tpu_custom_call.1} parent=11 // pred_fallthru
          _
        // Predicated region
        $region21: #{tpu_custom_call.1} parent=11 // pred_check
          %p379 = pneg %p196
        $region22: #{tpu_custom_call.1} parent=11 // pred_check_branch
          %381 = sbr.rel (%p379) target = $region24
        $region23: #{tpu_custom_call.1} parent=11 // pred_region
          %s383 = ssub.s32 512, 512
          %384 = vsyncadd [#allocation10], %s383
          %s385 = smul.addr %s38, 4
          %s386 = smul.addr %s385, 128
          %s387 = scalar_lea.hbm %s5, %s386
          %s388 = sshll.u32 [#allocation11], 4
          %s389 = int_to_ptr.vmem [resolvable:$true] %s388
          %394 = dma.hbm_to_vmem [thread:$0]  %s387, 512, %s389, [#allocation10], 128, 128, 8
        $region24: #{tpu_custom_call.1} parent=11 // pred_fallthru
          _
        // Predicated region
        $region25: #{tpu_custom_call.1} parent=11 // pred_check
          %p395 = pneg %p222
        $region26: #{tpu_custom_call.1} parent=11 // pred_check_branch
          %397 = sbr.rel (%p395) target = $region28
        $region27: #{tpu_custom_call.1} parent=11 // pred_region
          %p398 = scmp.lt.s32.totalorder %s38, 0
          %s399 = scalar_select %p398, %s38, 0
          %s400 = scalar_lea.vmem %s6, %s399
        $region28: #{tpu_custom_call.1} parent=11 // pred_fallthru
          _
        // Predicated region
        $region29: #{tpu_custom_call.1} parent=11 // pred_check
          %p401 = pneg %p248
        $region30: #{tpu_custom_call.1} parent=11 // pred_check_branch
          %403 = sbr.rel (%p401) target = $region32
        $region31: #{tpu_custom_call.1} parent=11 // pred_region
          %s405 = ssub.s32 512, 512
          %406 = vsyncadd [#allocation13], %s405
          %s407 = smul.addr %s38, 4
          %s408 = smul.addr %s407, 128
          %s409 = scalar_lea.hbm %s7, %s408
          %s410 = sshll.u32 [#allocation12], 4
          %s411 = int_to_ptr.vmem [resolvable:$true] %s410
          %416 = dma.hbm_to_vmem [thread:$0]  %s409, 512, %s411, [#allocation13], 128, 128, 8
        $region32: #{tpu_custom_call.1} parent=11 // pred_fallthru
          _
        // Predicated region
        $region33: #{tpu_custom_call.1} parent=11 // pred_check
          %p417 = pneg %p274
        $region34: #{tpu_custom_call.1} parent=11 // pred_check_branch
          %419 = sbr.rel (%p417) target = $region36
        $region35: #{tpu_custom_call.1} parent=11 // pred_region
          %s421 = ssub.s32 16, 16
          %422 = vsyncadd [#allocation13], %s421
          %s423 = smul.addr %s38, 16
          %s424 = scalar_lea.hbm %s8, %s423
          %s426 = sshll.u32 [#allocation14], 4
          %s427 = int_to_ptr.vmem [resolvable:$true] %s426
          %429 = dma.hbm_to_vmem [thread:$0]  %s424, 16, %s427, [#allocation13]
        $region36: #{tpu_custom_call.1} parent=11 // pred_fallthru
          _
        // Predicated region
        $region37: #{tpu_custom_call.1} parent=11 // pred_check
          %p430 = pneg %p295
        $region38: #{tpu_custom_call.1} parent=11 // pred_check_branch
          %432 = sbr.rel (%p430) target = $region40
        $region39: #{tpu_custom_call.1} parent=11 // pred_region
          _
        $region40: #{tpu_custom_call.1} parent=11 // pred_fallthru
          _
        // Predicated region
        $region41: #{tpu_custom_call.1} parent=11 // pred_check
          %p433 = pneg %p316
        $region42: #{tpu_custom_call.1} parent=11 // pred_check_branch
          %435 = sbr.rel (%p433) target = $region44
        $region43: #{tpu_custom_call.1} parent=11 // pred_region
          _
        $region44: #{tpu_custom_call.1} parent=11 // pred_fallthru
          _
      $region12: #{tpu_custom_call.1} parent=5 // pred_fallthru
        _
      %p436 = scmp.lt.s32.totalorder %s28, 2
      // Predicated region
      $region45: #{tpu_custom_call.1} parent=5 // pred_check
        %p437 = pneg %p436
      $region46: #{tpu_custom_call.1} parent=5 // pred_check_branch
        %439 = sbr.rel (%p437) target = $region48
      $region47: #{tpu_custom_call.1} parent=5 // pred_region
        // Predicated region
        $region49: #{tpu_custom_call.1} parent=47 // pred_check
          %p440 = pneg %p60
        $region50: #{tpu_custom_call.1} parent=47 // pred_check_branch
          %442 = sbr.rel (%p440) target = $region52
        $region51: #{tpu_custom_call.1} parent=47 // pred_region
          %s443 = sand.u32 %s50, 1
          %s444 = scalar_lea.sflag [#allocation4], %s443
          %s445 = sand.u32 %s50, 1
          %s446 = smul.addr %s445, 8
          %s447 = scalar_lea.vmem [#allocation3], %s446
          %s449 = ssub.s32 128, 128
          %450 = vsyncadd %s444, %s449
          %s451 = smul.addr %s35, 128
          %s452 = scalar_lea.hbm %s0, %s451
          %s454 = sshll.u32 %s447, 4
          %s455 = int_to_ptr.vmem [resolvable:$true] %s454
          %457 = dma.hbm_to_vmem [thread:$0]  %s452, 128, %s455, %s444
        $region52: #{tpu_custom_call.1} parent=47 // pred_fallthru
          _
        // Predicated region
        $region53: #{tpu_custom_call.1} parent=47 // pred_check
          %p458 = pneg %p86
        $region54: #{tpu_custom_call.1} parent=47 // pred_check_branch
          %460 = sbr.rel (%p458) target = $region56
        $region55: #{tpu_custom_call.1} parent=47 // pred_region
          %s461 = sand.u32 %s28, 1
          %s462 = scalar_lea.sflag [#allocation7], %s461
          %s463 = sand.u32 %s76, 1
          %s464 = smul.addr %s463, 8
          %s465 = scalar_lea.vmem [#allocation6], %s464
          %s467 = ssub.s32 128, 128
          %468 = vsyncadd %s462, %s467
          %s469 = smul.addr %s35, 128
          %s470 = scalar_lea.hbm %s1, %s469
          %s472 = sshll.u32 %s465, 4
          %s473 = int_to_ptr.vmem [resolvable:$true] %s472
          %475 = dma.hbm_to_vmem [thread:$0]  %s470, 128, %s473, %s462
        $region56: #{tpu_custom_call.1} parent=47 // pred_fallthru
          _
        // Predicated region
        $region57: #{tpu_custom_call.1} parent=47 // pred_check
          %p476 = pneg %p112
        $region58: #{tpu_custom_call.1} parent=47 // pred_check_branch
          %478 = sbr.rel (%p476) target = $region60
        $region59: #{tpu_custom_call.1} parent=47 // pred_region
          %s479 = sand.u32 %s28, 1
          %s480 = scalar_lea.sflag [#allocation7], %s479
          %s481 = sand.u32 %s102, 1
          %s482 = smul.addr %s481, 8
          %s483 = scalar_lea.vmem [#allocation8], %s482
          %s485 = ssub.s32 128, 128
          %486 = vsyncadd %s480, %s485
          %s487 = smul.addr %s35, 128
          %s488 = scalar_lea.hbm %s2, %s487
          %s490 = sshll.u32 %s483, 4
          %s491 = int_to_ptr.vmem [resolvable:$true] %s490
          %493 = dma.hbm_to_vmem [thread:$0]  %s488, 128, %s491, %s480
        $region60: #{tpu_custom_call.1} parent=47 // pred_fallthru
          _
      $region48: #{tpu_custom_call.1} parent=5 // pred_fallthru
        _
      %p494 = scmp.le.s32.totalorder 1, %s28
      %p495 = scmp.lt.s32.totalorder %s28, 3
      %p496 = pnand %p494, %p495
      %p497 = pneg %p496
      // Predicated region
      $region61: #{tpu_custom_call.1} parent=5 // pred_check
        _
      $region62: #{tpu_custom_call.1} parent=5 // pred_check_branch
        %499 = sbr.rel (%p496) target = $region64
      $region63: #{tpu_custom_call.1} parent=5 // pred_region
        %s500 = ssub.s32 %s28, 1
        %s501 = sand.u32 %s53, 1
        %s502 = scalar_lea.sflag [#allocation4], %s501
        %s503 = sand.u32 %s53, 1
        %s504 = smul.addr %s503, 8
        %s505 = scalar_lea.vmem [#allocation3], %s504
        // Predicated region
        $region65: #{tpu_custom_call.1} parent=63 // pred_check
          %p506 = pneg %p66
        $region66: #{tpu_custom_call.1} parent=63 // pred_check_branch
          %508 = sbr.rel (%p506) target = $region68
        $region67: #{tpu_custom_call.1} parent=63 // pred_region
          %509 = dma.done %s502, 128
        $region68: #{tpu_custom_call.1} parent=63 // pred_fallthru
          _
        %s510 = sand.u32 %s33, 1
        %s511 = scalar_lea.sflag [#allocation7], %s510
        %s512 = sand.u32 %s79, 1
        %s513 = smul.addr %s512, 8
        %s514 = scalar_lea.vmem [#allocation6], %s513
        // Predicated region
        $region69: #{tpu_custom_call.1} parent=63 // pred_check
          %p515 = pneg %p92
        $region70: #{tpu_custom_call.1} parent=63 // pred_check_branch
          %517 = sbr.rel (%p515) target = $region72
        $region71: #{tpu_custom_call.1} parent=63 // pred_region
          %518 = dma.done %s511, 128
        $region72: #{tpu_custom_call.1} parent=63 // pred_fallthru
          _
        %s519 = sand.u32 %s33, 1
        %s520 = scalar_lea.sflag [#allocation7], %s519
        %s521 = sand.u32 %s105, 1
        %s522 = smul.addr %s521, 8
        %s523 = scalar_lea.vmem [#allocation8], %s522
        // Predicated region
        $region73: #{tpu_custom_call.1} parent=63 // pred_check
          %p524 = pneg %p118
        $region74: #{tpu_custom_call.1} parent=63 // pred_check_branch
          %526 = sbr.rel (%p524) target = $region76
        $region75: #{tpu_custom_call.1} parent=63 // pred_region
          %527 = dma.done %s520, 128
        $region76: #{tpu_custom_call.1} parent=63 // pred_fallthru
          _
        // Predicated region
        $region77: #{tpu_custom_call.1} parent=63 // pred_check
          %p528 = pneg %p144
        $region78: #{tpu_custom_call.1} parent=63 // pred_check_branch
          %530 = sbr.rel (%p528) target = $region80
        $region79: #{tpu_custom_call.1} parent=63 // pred_region
          %531 = dma.done [#allocation10], 512
        $region80: #{tpu_custom_call.1} parent=63 // pred_fallthru
          _
        // Predicated region
        $region81: #{tpu_custom_call.1} parent=63 // pred_check
          %p532 = pneg %p196
        $region82: #{tpu_custom_call.1} parent=63 // pred_check_branch
          %534 = sbr.rel (%p532) target = $region84
        $region83: #{tpu_custom_call.1} parent=63 // pred_region
          %535 = dma.done [#allocation10], 512
        $region84: #{tpu_custom_call.1} parent=63 // pred_fallthru
          _
        // Predicated region
        $region85: #{tpu_custom_call.1} parent=63 // pred_check
          %p536 = pneg %p248
        $region86: #{tpu_custom_call.1} parent=63 // pred_check_branch
          %538 = sbr.rel (%p536) target = $region88
        $region87: #{tpu_custom_call.1} parent=63 // pred_region
          %539 = dma.done [#allocation13], 512
        $region88: #{tpu_custom_call.1} parent=63 // pred_fallthru
          _
        // Predicated region
        $region89: #{tpu_custom_call.1} parent=63 // pred_check
          %p540 = pneg %p274
        $region90: #{tpu_custom_call.1} parent=63 // pred_check_branch
          %542 = sbr.rel (%p540) target = $region92
        $region91: #{tpu_custom_call.1} parent=63 // pred_region
          %543 = dma.done [#allocation13], 16
        $region92: #{tpu_custom_call.1} parent=63 // pred_fallthru
          _
        %s544 = sand.u32 %s53, 1
        %s545 = scalar_lea.sflag [#allocation4], %s544
        %s546 = sand.u32 %s53, 1
        %s547 = smul.addr %s546, 8
        %s548 = scalar_lea.vmem [#allocation3], %s547
        %p549 = pneg %p66
        %p550 = pneg %p63
        %s551 = sand.u32 %s33, 1
        %s552 = scalar_lea.sflag [#allocation7], %s551
        %s553 = sand.u32 %s79, 1
        %s554 = smul.addr %s553, 8
        %s555 = scalar_lea.vmem [#allocation6], %s554
        %p556 = pneg %p92
        %p557 = pneg %p89
        %s558 = sand.u32 %s33, 1
        %s559 = scalar_lea.sflag [#allocation7], %s558
        %s560 = sand.u32 %s105, 1
        %s561 = smul.addr %s560, 8
        %s562 = scalar_lea.vmem [#allocation8], %s561
        %p563 = pneg %p118
        %p564 = pneg %p115
        %p565 = pneg %p144
        %p566 = pneg %p141
        %p567 = scmp.lt.s32.totalorder %s38, 0
        %s568 = scalar_select %p567, %s38, 0
        %s569 = scalar_lea.vmem %s4, %s568
        %p570 = pneg %p170
        %p571 = pneg %p167
        %p572 = pneg %p196
        %p573 = pneg %p193
        %p574 = scmp.lt.s32.totalorder %s38, 0
        %s575 = scalar_select %p574, %s38, 0
        %s576 = scalar_lea.vmem %s6, %s575
        %p577 = pneg %p222
        %p578 = pneg %p219
        %p579 = pneg %p248
        %p580 = pneg %p245
        %p581 = pneg %p274
        %p582 = pneg %p271
        %p583 = pneg %p295
        %p584 = pneg %p292
        %p585 = pneg %p316
        %p586 = pneg %p313
        %p587 = pneg %p342
        %p588 = pneg %p339
        %s589 = sand.u32 %s329, 1
        %s590 = scalar_lea.sflag [#allocation5], %s589
        %s591 = sand.u32 %s329, 1
        %s592 = smul.addr %s591, 8
        %s593 = scalar_lea.vmem [#allocation15], %s592
        %p594 = scmp.lt.s32.totalorder %s38, 0
        %s595 = scalar_select %p594, %s38, 0
        %s596 = scalar_lea.vmem %s4, %s595
        %p597 = scmp.lt.s32.totalorder %s38, 0
        %s598 = scalar_select %p597, %s38, 0
        %s599 = scalar_lea.vmem %s6, %s598
        %v600 = vld [vmem:[%s505] sm:$0xff]
        %v601 = vld [vmem:[%s514] sm:$0xff]
        %v602 = vld [vmem:[%s523] sm:$0xff]
        %v603 = vld [vmem:[#allocation9] sm:$0xff]
        %v604 = vld [vmem:[#allocation9 + $0x8] sm:$0xff]
        %v605 = vld [vmem:[#allocation9 + $0x10] sm:$0xff]
        %v606 = vld [vmem:[#allocation9 + $0x18] sm:$0xff]
        %v607 = vld [vmem:[%s596] sm:$0x1]
        %v609 = vlaneseq
        %v610 = vshrl.u32 %v609, 7
        %v611 = vsub.s32 0, %v610
        %v612 = vrot.slane %v607, %v611
        %vm614 = vcmask 261120
        %v616 = vsel %vm614, %v600, 0
        %618 = vmatprep.subr.mxu0 0.0
        %619 = vmatpush1.msra.mxu0 %v603
        %620 = vmatprep.subr.mxu0 0.0
        %621 = vmatpush1.msra.mxu0 %v604
        %622 = vmatprep.subr.mxu0 0.0
        %623 = vmatpush1.msra.mxu0 %v605
        %624 = vmatprep.subr.mxu0 0.0
        %625 = vmatpush1.msra.mxu0 %v606
        %626 = vmatprep.subr.mxu0 0.0
        %627 = vmatpush1.msra.mxu0 0.0
        %628 = vmatprep.subr.mxu0 0.0
        %629 = vmatpush1.msra.mxu0 0.0
        %630 = vmatprep.subr.mxu0 0.0
        %631 = vmatpush1.msra.mxu0 0.0
        %632 = vmatprep.subr.mxu0 0.0
        %633 = vmatpush1.msra.mxu0 0.0
        %634 = vmatprep.subr.mxu0 0.0
        %635 = vmatpush1.msra.mxu0 0.0
        %636 = vmatprep.subr.mxu0 0.0
        %637 = vmatpush1.msra.mxu0 0.0
        %638 = vmatprep.subr.mxu0 0.0
        %639 = vmatpush1.msra.mxu0 0.0
        %640 = vmatprep.subr.mxu0 0.0
        %641 = vmatpush1.msra.mxu0 0.0
        %642 = vmatprep.subr.mxu0 0.0
        %643 = vmatpush1.msra.mxu0 0.0
        %644 = vmatprep.subr.mxu0 0.0
        %645 = vmatpush1.msra.mxu0 0.0
        %646 = vmatprep.subr.mxu0 0.0
        %647 = vmatpush1.msra.mxu0 0.0
        %648 = vmatprep.subr.mxu0 0.0
        %649 = vmatpush1.msra.mxu0 0.0
        %650 = vmatprep.subr.mxu0 0.0
        %651 = vmatpush1.msra.mxu0 0.0
        %652 = vmatprep.subr.mxu0 0.0
        %653 = vmatpush1.msra.mxu0 0.0
        %654 = vmatprep.subr.mxu0 0.0
        %655 = vmatpush1.msra.mxu0 0.0
        %656 = vmatprep.subr.mxu0 0.0
        %657 = vmatpush1.msra.mxu0 0.0
        %658 = vmatprep.subr.mxu0 0.0
        %659 = vmatpush1.msra.mxu0 0.0
        %660 = vmatprep.subr.mxu0 0.0
        %661 = vmatpush1.msra.mxu0 0.0
        %662 = vmatprep.subr.mxu0 0.0
        %663 = vmatpush1.msra.mxu0 0.0
        %664 = vmatprep.subr.mxu0 0.0
        %665 = vmatpush1.msra.mxu0 0.0
        %666 = vmatprep.subr.mxu0 0.0
        %667 = vmatpush1.msra.mxu0 0.0
        %668 = vmatprep.subr.mxu0 0.0
        %669 = vmatpush1.msra.mxu0 0.0
        %670 = vmatprep.subr.mxu0 0.0
        %671 = vmatpush1.msra.mxu0 0.0
        %672 = vmatprep.subr.mxu0 0.0
        %673 = vmatpush1.msra.mxu0 0.0
        %674 = vmatprep.subr.mxu0 0.0
        %675 = vmatpush1.msra.mxu0 0.0
        %676 = vmatprep.subr.mxu0 0.0
        %677 = vmatpush1.msra.mxu0 0.0
        %678 = vmatprep.subr.mxu0 0.0
        %679 = vmatpush1.msra.mxu0 0.0
        %680 = vmatprep.subr.mxu0 0.0
        %681 = vmatpush1.msra.mxu0 0.0
        %682 = vmatprep.mubr.f32.mxu0 0.0
        %683 = vmatmul.mubr.f32.gmra.mrb[0].mxu0 %v616
        %v684 = vpop.f32.mrb[0].mxu0
        %v685 = vadd.f32 %v612, %v684
        %v686 = vpop.f32.mrb[0].mxu0
        %687 = vdwg.mxu0
        %v688 = vld [vmem:[#allocation11] sm:$0xff]
        %v689 = vld [vmem:[#allocation11 + $0x8] sm:$0xff]
        %v690 = vld [vmem:[#allocation11 + $0x10] sm:$0xff]
        %v691 = vld [vmem:[#allocation11 + $0x18] sm:$0xff]
        %v692 = vld [vmem:[%s599] sm:$0x1]
        %v694 = vlaneseq
        %v695 = vshrl.u32 %v694, 7
        %v696 = vsub.s32 0, %v695
        %v697 = vrot.slane %v692, %v696
        %v700 = vsel %vm614, %v601, 0
        %702 = vmatprep.subr.mxu0 0.0
        %703 = vmatpush1.msra.mxu0 %v688
        %704 = vmatprep.subr.mxu0 0.0
        %705 = vmatpush1.msra.mxu0 %v689
        %706 = vmatprep.subr.mxu0 0.0
        %707 = vmatpush1.msra.mxu0 %v690
        %708 = vmatprep.subr.mxu0 0.0
        %709 = vmatpush1.msra.mxu0 %v691
        %710 = vmatprep.subr.mxu0 0.0
        %711 = vmatpush1.msra.mxu0 0.0
        %712 = vmatprep.subr.mxu0 0.0
        %713 = vmatpush1.msra.mxu0 0.0
        %714 = vmatprep.subr.mxu0 0.0
        %715 = vmatpush1.msra.mxu0 0.0
        %716 = vmatprep.subr.mxu0 0.0
        %717 = vmatpush1.msra.mxu0 0.0
        %718 = vmatprep.subr.mxu0 0.0
        %719 = vmatpush1.msra.mxu0 0.0
        %720 = vmatprep.subr.mxu0 0.0
        %721 = vmatpush1.msra.mxu0 0.0
        %722 = vmatprep.subr.mxu0 0.0
        %723 = vmatpush1.msra.mxu0 0.0
        %724 = vmatprep.subr.mxu0 0.0
        %725 = vmatpush1.msra.mxu0 0.0
        %726 = vmatprep.subr.mxu0 0.0
        %727 = vmatpush1.msra.mxu0 0.0
        %728 = vmatprep.subr.mxu0 0.0
        %729 = vmatpush1.msra.mxu0 0.0
        %730 = vmatprep.subr.mxu0 0.0
        %731 = vmatpush1.msra.mxu0 0.0
        %732 = vmatprep.subr.mxu0 0.0
        %733 = vmatpush1.msra.mxu0 0.0
        %734 = vmatprep.subr.mxu0 0.0
        %735 = vmatpush1.msra.mxu0 0.0
        %736 = vmatprep.subr.mxu0 0.0
        %737 = vmatpush1.msra.mxu0 0.0
        %738 = vmatprep.subr.mxu0 0.0
        %739 = vmatpush1.msra.mxu0 0.0
        %740 = vmatprep.subr.mxu0 0.0
        %741 = vmatpush1.msra.mxu0 0.0
        %742 = vmatprep.subr.mxu0 0.0
        %743 = vmatpush1.msra.mxu0 0.0
        %744 = vmatprep.subr.mxu0 0.0
        %745 = vmatpush1.msra.mxu0 0.0
        %746 = vmatprep.subr.mxu0 0.0
        %747 = vmatpush1.msra.mxu0 0.0
        %748 = vmatprep.subr.mxu0 0.0
        %749 = vmatpush1.msra.mxu0 0.0
        %750 = vmatprep.subr.mxu0 0.0
        %751 = vmatpush1.msra.mxu0 0.0
        %752 = vmatprep.subr.mxu0 0.0
        %753 = vmatpush1.msra.mxu0 0.0
        %754 = vmatprep.subr.mxu0 0.0
        %755 = vmatpush1.msra.mxu0 0.0
        %756 = vmatprep.subr.mxu0 0.0
        %757 = vmatpush1.msra.mxu0 0.0
        %758 = vmatprep.subr.mxu0 0.0
        %759 = vmatpush1.msra.mxu0 0.0
        %760 = vmatprep.subr.mxu0 0.0
        %761 = vmatpush1.msra.mxu0 0.0
        %762 = vmatprep.subr.mxu0 0.0
        %763 = vmatpush1.msra.mxu0 0.0
        %764 = vmatprep.subr.mxu0 0.0
        %765 = vmatpush1.msra.mxu0 0.0
        %766 = vmatprep.mubr.f32.mxu0 0.0
        %767 = vmatmul.mubr.f32.gmra.mrb[0].mxu0 %v700
        %v768 = vpop.f32.mrb[0].mxu0
        %v769 = vadd.f32 %v697, %v768
        %v770 = vpop.f32.mrb[0].mxu0
        %771 = vdwg.mxu0
        %v772 = vld [vmem:[#allocation12] sm:$0xff]
        %v773 = vld [vmem:[#allocation12 + $0x8] sm:$0xff]
        %v774 = vld [vmem:[#allocation12 + $0x10] sm:$0xff]
        %v775 = vld [vmem:[#allocation12 + $0x18] sm:$0xff]
        %v776 = vld [vmem:[#allocation14] sm:$0x1]
        %v778 = vlaneseq
        %v779 = vshrl.u32 %v778, 7
        %v780 = vsub.s32 0, %v779
        %v781 = vrot.slane %v776, %v780
        %v784 = vsel %vm614, %v602, 0
        %786 = vmatprep.subr.mxu0 0.0
        %787 = vmatpush1.msra.mxu0 %v772
        %788 = vmatprep.subr.mxu0 0.0
        %789 = vmatpush1.msra.mxu0 %v773
        %790 = vmatprep.subr.mxu0 0.0
        %791 = vmatpush1.msra.mxu0 %v774
        %792 = vmatprep.subr.mxu0 0.0
        %793 = vmatpush1.msra.mxu0 %v775
        %794 = vmatprep.subr.mxu0 0.0
        %795 = vmatpush1.msra.mxu0 0.0
        %796 = vmatprep.subr.mxu0 0.0
        %797 = vmatpush1.msra.mxu0 0.0
        %798 = vmatprep.subr.mxu0 0.0
        %799 = vmatpush1.msra.mxu0 0.0
        %800 = vmatprep.subr.mxu0 0.0
        %801 = vmatpush1.msra.mxu0 0.0
        %802 = vmatprep.subr.mxu0 0.0
        %803 = vmatpush1.msra.mxu0 0.0
        %804 = vmatprep.subr.mxu0 0.0
        %805 = vmatpush1.msra.mxu0 0.0
        %806 = vmatprep.subr.mxu0 0.0
        %807 = vmatpush1.msra.mxu0 0.0
        %808 = vmatprep.subr.mxu0 0.0
        %809 = vmatpush1.msra.mxu0 0.0
        %810 = vmatprep.subr.mxu0 0.0
        %811 = vmatpush1.msra.mxu0 0.0
        %812 = vmatprep.subr.mxu0 0.0
        %813 = vmatpush1.msra.mxu0 0.0
        %814 = vmatprep.subr.mxu0 0.0
        %815 = vmatpush1.msra.mxu0 0.0
        %816 = vmatprep.subr.mxu0 0.0
        %817 = vmatpush1.msra.mxu0 0.0
        %818 = vmatprep.subr.mxu0 0.0
        %819 = vmatpush1.msra.mxu0 0.0
        %820 = vmatprep.subr.mxu0 0.0
        %821 = vmatpush1.msra.mxu0 0.0
        %822 = vmatprep.subr.mxu0 0.0
        %823 = vmatpush1.msra.mxu0 0.0
        %824 = vmatprep.subr.mxu0 0.0
        %825 = vmatpush1.msra.mxu0 0.0
        %826 = vmatprep.subr.mxu0 0.0
        %827 = vmatpush1.msra.mxu0 0.0
        %828 = vmatprep.subr.mxu0 0.0
        %829 = vmatpush1.msra.mxu0 0.0
        %830 = vmatprep.subr.mxu0 0.0
        %831 = vmatpush1.msra.mxu0 0.0
        %832 = vmatprep.subr.mxu0 0.0
        %833 = vmatpush1.msra.mxu0 0.0
        %834 = vmatprep.subr.mxu0 0.0
        %835 = vmatpush1.msra.mxu0 0.0
        %836 = vmatprep.subr.mxu0 0.0
        %837 = vmatpush1.msra.mxu0 0.0
        %838 = vmatprep.subr.mxu0 0.0
        %839 = vmatpush1.msra.mxu0 0.0
        %840 = vmatprep.subr.mxu0 0.0
        %841 = vmatpush1.msra.mxu0 0.0
        %842 = vmatprep.subr.mxu0 0.0
        %843 = vmatpush1.msra.mxu0 0.0
        %844 = vmatprep.subr.mxu0 0.0
        %845 = vmatpush1.msra.mxu0 0.0
        %846 = vmatprep.subr.mxu0 0.0
        %847 = vmatpush1.msra.mxu0 0.0
        %848 = vmatprep.subr.mxu0 0.0
        %849 = vmatpush1.msra.mxu0 0.0
        %850 = vmatprep.mubr.f32.mxu0 0.0
        %851 = vmatmul.mubr.f32.gmra.mrb[0].mxu0 %v784
        %v852 = vpop.f32.mrb[0].mxu0
        %v853 = vadd.f32 %v781, %v852
        %v854 = vpop.f32.mrb[0].mxu0
        %855 = vdwg.mxu0
        %vm856 = vcmask 64512
        %v858 = vsel %vm856, %v685, 0
        %v861 = vsel %vm856, %v769, 0
        %863 = vmatprep.subr.mxu0 0.0
        %864 = vmatpush1.xpose.msra.mxu0 %v861
        %865 = vmatprep.subr.mxu0 0.0
        %866 = vmatpush1.xpose.msra.mxu0 0.0
        %867 = vmatprep.subr.mxu0 0.0
        %868 = vmatpush1.xpose.msra.mxu0 0.0
        %869 = vmatprep.subr.mxu0 0.0
        %870 = vmatpush1.xpose.msra.mxu0 0.0
        %871 = vmatprep.subr.mxu0 0.0
        %872 = vmatpush1.xpose.msra.mxu0 0.0
        %873 = vmatprep.subr.mxu0 0.0
        %874 = vmatpush1.xpose.msra.mxu0 0.0
        %875 = vmatprep.subr.mxu0 0.0
        %876 = vmatpush1.xpose.msra.mxu0 0.0
        %877 = vmatprep.subr.mxu0 0.0
        %878 = vmatpush1.xpose.msra.mxu0 0.0
        %879 = vmatprep.subr.mxu0 0.0
        %880 = vmatpush1.xpose.msra.mxu0 0.0
        %881 = vmatprep.subr.mxu0 0.0
        %882 = vmatpush1.xpose.msra.mxu0 0.0
        %883 = vmatprep.subr.mxu0 0.0
        %884 = vmatpush1.xpose.msra.mxu0 0.0
        %885 = vmatprep.subr.mxu0 0.0
        %886 = vmatpush1.xpose.msra.mxu0 0.0
        %887 = vmatprep.subr.mxu0 0.0
        %888 = vmatpush1.xpose.msra.mxu0 0.0
        %889 = vmatprep.subr.mxu0 0.0
        %890 = vmatpush1.xpose.msra.mxu0 0.0
        %891 = vmatprep.subr.mxu0 0.0
        %892 = vmatpush1.xpose.msra.mxu0 0.0
        %893 = vmatprep.subr.mxu0 0.0
        %894 = vmatpush1.xpose.msra.mxu0 0.0
        %895 = vmatprep.subr.mxu0 0.0
        %896 = vmatpush1.xpose.msra.mxu0 0.0
        %897 = vmatprep.subr.mxu0 0.0
        %898 = vmatpush1.xpose.msra.mxu0 0.0
        %899 = vmatprep.subr.mxu0 0.0
        %900 = vmatpush1.xpose.msra.mxu0 0.0
        %901 = vmatprep.subr.mxu0 0.0
        %902 = vmatpush1.xpose.msra.mxu0 0.0
        %903 = vmatprep.subr.mxu0 0.0
        %904 = vmatpush1.xpose.msra.mxu0 0.0
        %905 = vmatprep.subr.mxu0 0.0
        %906 = vmatpush1.xpose.msra.mxu0 0.0
        %907 = vmatprep.subr.mxu0 0.0
        %908 = vmatpush1.xpose.msra.mxu0 0.0
        %909 = vmatprep.subr.mxu0 0.0
        %910 = vmatpush1.xpose.msra.mxu0 0.0
        %911 = vmatprep.subr.mxu0 0.0
        %912 = vmatpush1.xpose.msra.mxu0 0.0
        %913 = vmatprep.subr.mxu0 0.0
        %914 = vmatpush1.xpose.msra.mxu0 0.0
        %915 = vmatprep.subr.mxu0 0.0
        %916 = vmatpush1.xpose.msra.mxu0 0.0
        %917 = vmatprep.subr.mxu0 0.0
        %918 = vmatpush1.xpose.msra.mxu0 0.0
        %919 = vmatprep.subr.mxu0 0.0
        %920 = vmatpush1.xpose.msra.mxu0 0.0
        %921 = vmatprep.subr.mxu0 0.0
        %922 = vmatpush1.xpose.msra.mxu0 0.0
        %923 = vmatprep.subr.mxu0 0.0
        %924 = vmatpush1.xpose.msra.mxu0 0.0
        %925 = vmatprep.subr.mxu0 0.0
        %926 = vmatpush1.xpose.msra.mxu0 0.0
        %927 = vmatprep.mubr.f32.mxu0 0.0
        %928 = vmatmul.mubr.f32.gmra.mrb[0].mxu0 %v858
        %v929 = vpop.f32.mrb[0].mxu0
        %v930 = vadd.f32 0.0, %v929
        %v931 = vpop.f32.mrb[0].mxu0
        %932 = vdwg.mxu0
        %v933 = vsel %vm856, %v930, -inf
        %934 = vmax.xlane.f32.xlu0 %v933
        %v935 = vpop.xlane.xlu0 %934
        %v936 = vsub.f32 %v930, %v935
        %v937 = vmul.f32 %v936, 1.442695
        %v938 = vpow.pop %v937
        %v939 = vsel %vm856, %v938, 0.0
        %940 = vadd.xlane.f32.xlu0 %v939
        %v941 = vpop.xlane.xlu0 %940
        %v942 = vrcp.pop %v941
        %v943 = vmul.f32 %v938, %v942
        %v945 = vsel %vm856, %v943, 0
        %947 = vmatprep.subr.mxu0 0.0
        %948 = vmatpush1.msra.mxu0 %v853
        %949 = vmatprep.subr.mxu0 0.0
        %950 = vmatpush1.msra.mxu0 0.0
        %951 = vmatprep.subr.mxu0 0.0
        %952 = vmatpush1.msra.mxu0 0.0
        %953 = vmatprep.subr.mxu0 0.0
        %954 = vmatpush1.msra.mxu0 0.0
        %955 = vmatprep.subr.mxu0 0.0
        %956 = vmatpush1.msra.mxu0 0.0
        %957 = vmatprep.subr.mxu0 0.0
        %958 = vmatpush1.msra.mxu0 0.0
        %959 = vmatprep.subr.mxu0 0.0
        %960 = vmatpush1.msra.mxu0 0.0
        %961 = vmatprep.subr.mxu0 0.0
        %962 = vmatpush1.msra.mxu0 0.0
        %963 = vmatprep.subr.mxu0 0.0
        %964 = vmatpush1.msra.mxu0 0.0
        %965 = vmatprep.subr.mxu0 0.0
        %966 = vmatpush1.msra.mxu0 0.0
        %967 = vmatprep.subr.mxu0 0.0
        %968 = vmatpush1.msra.mxu0 0.0
        %969 = vmatprep.subr.mxu0 0.0
        %970 = vmatpush1.msra.mxu0 0.0
        %971 = vmatprep.subr.mxu0 0.0
        %972 = vmatpush1.msra.mxu0 0.0
        %973 = vmatprep.subr.mxu0 0.0
        %974 = vmatpush1.msra.mxu0 0.0
        %975 = vmatprep.subr.mxu0 0.0
        %976 = vmatpush1.msra.mxu0 0.0
        %977 = vmatprep.subr.mxu0 0.0
        %978 = vmatpush1.msra.mxu0 0.0
        %979 = vmatprep.subr.mxu0 0.0
        %980 = vmatpush1.msra.mxu0 0.0
        %981 = vmatprep.subr.mxu0 0.0
        %982 = vmatpush1.msra.mxu0 0.0
        %983 = vmatprep.subr.mxu0 0.0
        %984 = vmatpush1.msra.mxu0 0.0
        %985 = vmatprep.subr.mxu0 0.0
        %986 = vmatpush1.msra.mxu0 0.0
        %987 = vmatprep.subr.mxu0 0.0
        %988 = vmatpush1.msra.mxu0 0.0
        %989 = vmatprep.subr.mxu0 0.0
        %990 = vmatpush1.msra.mxu0 0.0
        %991 = vmatprep.subr.mxu0 0.0
        %992 = vmatpush1.msra.mxu0 0.0
        %993 = vmatprep.subr.mxu0 0.0
        %994 = vmatpush1.msra.mxu0 0.0
        %995 = vmatprep.subr.mxu0 0.0
        %996 = vmatpush1.msra.mxu0 0.0
        %997 = vmatprep.subr.mxu0 0.0
        %998 = vmatpush1.msra.mxu0 0.0
        %999 = vmatprep.subr.mxu0 0.0
        %1000 = vmatpush1.msra.mxu0 0.0
        %1001 = vmatprep.subr.mxu0 0.0
        %1002 = vmatpush1.msra.mxu0 0.0
        %1003 = vmatprep.subr.mxu0 0.0
        %1004 = vmatpush1.msra.mxu0 0.0
        %1005 = vmatprep.subr.mxu0 0.0
        %1006 = vmatpush1.msra.mxu0 0.0
        %1007 = vmatprep.subr.mxu0 0.0
        %1008 = vmatpush1.msra.mxu0 0.0
        %1009 = vmatprep.subr.mxu0 0.0
        %1010 = vmatpush1.msra.mxu0 0.0
        %1011 = vmatprep.mubr.f32.mxu0 0.0
        %1012 = vmatmul.mubr.f32.gmra.mrb[0].mxu0 %v945
        %v1013 = vpop.f32.mrb[0].mxu0
        %v1014 = vadd.f32 0.0, %v1013
        %v1015 = vpop.f32.mrb[0].mxu0
        %1016 = vdwg.mxu0
        %s1017 = smul.u32 %s38, 8
        %s1018 = scalar_lea.vmem [#allocation2], %s1017
        %1019 = vst.msk [vmem:[%s1018] sm:$0xff] %vm856, %v1014
        %1020 = vrot.lane.b32.xlu0 %v685, 120
        %v1021 = vpop.permute.xlu0 %1020
        %1022 = vrot.lane.b32.xlu0 %v769, 120
        %v1023 = vpop.permute.xlu0 %1022
        %v1024 = vsel %vm856, %v1021, 0
        %v1026 = vsel %vm856, %v1023, 0
        %1028 = vmatprep.subr.mxu0 0.0
        %1029 = vmatpush1.xpose.msra.mxu0 %v1026
        %1030 = vmatprep.subr.mxu0 0.0
        %1031 = vmatpush1.xpose.msra.mxu0 0.0
        %1032 = vmatprep.subr.mxu0 0.0
        %1033 = vmatpush1.xpose.msra.mxu0 0.0
        %1034 = vmatprep.subr.mxu0 0.0
        %1035 = vmatpush1.xpose.msra.mxu0 0.0
        %1036 = vmatprep.subr.mxu0 0.0
        %1037 = vmatpush1.xpose.msra.mxu0 0.0
        %1038 = vmatprep.subr.mxu0 0.0
        %1039 = vmatpush1.xpose.msra.mxu0 0.0
        %1040 = vmatprep.subr.mxu0 0.0
        %1041 = vmatpush1.xpose.msra.mxu0 0.0
        %1042 = vmatprep.subr.mxu0 0.0
        %1043 = vmatpush1.xpose.msra.mxu0 0.0
        %1044 = vmatprep.subr.mxu0 0.0
        %1045 = vmatpush1.xpose.msra.mxu0 0.0
        %1046 = vmatprep.subr.mxu0 0.0
        %1047 = vmatpush1.xpose.msra.mxu0 0.0
        %1048 = vmatprep.subr.mxu0 0.0
        %1049 = vmatpush1.xpose.msra.mxu0 0.0
        %1050 = vmatprep.subr.mxu0 0.0
        %1051 = vmatpush1.xpose.msra.mxu0 0.0
        %1052 = vmatprep.subr.mxu0 0.0
        %1053 = vmatpush1.xpose.msra.mxu0 0.0
        %1054 = vmatprep.subr.mxu0 0.0
        %1055 = vmatpush1.xpose.msra.mxu0 0.0
        %1056 = vmatprep.subr.mxu0 0.0
        %1057 = vmatpush1.xpose.msra.mxu0 0.0
        %1058 = vmatprep.subr.mxu0 0.0
        %1059 = vmatpush1.xpose.msra.mxu0 0.0
        %1060 = vmatprep.subr.mxu0 0.0
        %1061 = vmatpush1.xpose.msra.mxu0 0.0
        %1062 = vmatprep.subr.mxu0 0.0
        %1063 = vmatpush1.xpose.msra.mxu0 0.0
        %1064 = vmatprep.subr.mxu0 0.0
        %1065 = vmatpush1.xpose.msra.mxu0 0.0
        %1066 = vmatprep.subr.mxu0 0.0
        %1067 = vmatpush1.xpose.msra.mxu0 0.0
        %1068 = vmatprep.subr.mxu0 0.0
        %1069 = vmatpush1.xpose.msra.mxu0 0.0
        %1070 = vmatprep.subr.mxu0 0.0
        %1071 = vmatpush1.xpose.msra.mxu0 0.0
        %1072 = vmatprep.subr.mxu0 0.0
        %1073 = vmatpush1.xpose.msra.mxu0 0.0
        %1074 = vmatprep.subr.mxu0 0.0
        %1075 = vmatpush1.xpose.msra.mxu0 0.0
        %1076 = vmatprep.subr.mxu0 0.0
        %1077 = vmatpush1.xpose.msra.mxu0 0.0
        %1078 = vmatprep.subr.mxu0 0.0
        %1079 = vmatpush1.xpose.msra.mxu0 0.0
        %1080 = vmatprep.subr.mxu0 0.0
        %1081 = vmatpush1.xpose.msra.mxu0 0.0
        %1082 = vmatprep.subr.mxu0 0.0
        %1083 = vmatpush1.xpose.msra.mxu0 0.0
        %1084 = vmatprep.subr.mxu0 0.0
        %1085 = vmatpush1.xpose.msra.mxu0 0.0
        %1086 = vmatprep.subr.mxu0 0.0
        %1087 = vmatpush1.xpose.msra.mxu0 0.0
        %1088 = vmatprep.subr.mxu0 0.0
        %1089 = vmatpush1.xpose.msra.mxu0 0.0
        %1090 = vmatprep.subr.mxu0 0.0
        %1091 = vmatpush1.xpose.msra.mxu0 0.0
        %1092 = vmatprep.mubr.f32.mxu0 0.0
        %1093 = vmatmul.mubr.f32.gmra.mrb[0].mxu0 %v1024
        %v1094 = vpop.f32.mrb[0].mxu0
        %v1095 = vadd.f32 0.0, %v1094
        %v1096 = vpop.f32.mrb[0].mxu0
        %1097 = vdwg.mxu0
        %v1098 = vsel %vm856, %v1095, -inf
        %1099 = vmax.xlane.f32.xlu0 %v1098
        %v1100 = vpop.xlane.xlu0 %1099
        %v1101 = vsub.f32 %v1095, %v1100
        %v1102 = vmul.f32 %v1101, 1.442695
        %v1103 = vpow.pop %v1102
        %v1104 = vsel %vm856, %v1103, 0.0
        %1105 = vadd.xlane.f32.xlu0 %v1104
        %v1106 = vpop.xlane.xlu0 %1105
        %v1107 = vrcp.pop %v1106
        %v1108 = vmul.f32 %v1103, %v1107
        %1110 = vrot.lane.b32.xlu0 %v853, 120
        %v1111 = vpop.permute.xlu0 %1110
        %v1114 = vsel %vm856, %v1108, 0
        %1116 = vmatprep.subr.mxu0 0.0
        %1117 = vmatpush1.msra.mxu0 %v1111
        %1118 = vmatprep.subr.mxu0 0.0
        %1119 = vmatpush1.msra.mxu0 0.0
        %1120 = vmatprep.subr.mxu0 0.0
        %1121 = vmatpush1.msra.mxu0 0.0
        %1122 = vmatprep.subr.mxu0 0.0
        %1123 = vmatpush1.msra.mxu0 0.0
        %1124 = vmatprep.subr.mxu0 0.0
        %1125 = vmatpush1.msra.mxu0 0.0
        %1126 = vmatprep.subr.mxu0 0.0
        %1127 = vmatpush1.msra.mxu0 0.0
        %1128 = vmatprep.subr.mxu0 0.0
        %1129 = vmatpush1.msra.mxu0 0.0
        %1130 = vmatprep.subr.mxu0 0.0
        %1131 = vmatpush1.msra.mxu0 0.0
        %1132 = vmatprep.subr.mxu0 0.0
        %1133 = vmatpush1.msra.mxu0 0.0
        %1134 = vmatprep.subr.mxu0 0.0
        %1135 = vmatpush1.msra.mxu0 0.0
        %1136 = vmatprep.subr.mxu0 0.0
        %1137 = vmatpush1.msra.mxu0 0.0
        %1138 = vmatprep.subr.mxu0 0.0
        %1139 = vmatpush1.msra.mxu0 0.0
        %1140 = vmatprep.subr.mxu0 0.0
        %1141 = vmatpush1.msra.mxu0 0.0
        %1142 = vmatprep.subr.mxu0 0.0
        %1143 = vmatpush1.msra.mxu0 0.0
        %1144 = vmatprep.subr.mxu0 0.0
        %1145 = vmatpush1.msra.mxu0 0.0
        %1146 = vmatprep.subr.mxu0 0.0
        %1147 = vmatpush1.msra.mxu0 0.0
        %1148 = vmatprep.subr.mxu0 0.0
        %1149 = vmatpush1.msra.mxu0 0.0
        %1150 = vmatprep.subr.mxu0 0.0
        %1151 = vmatpush1.msra.mxu0 0.0
        %1152 = vmatprep.subr.mxu0 0.0
        %1153 = vmatpush1.msra.mxu0 0.0
        %1154 = vmatprep.subr.mxu0 0.0
        %1155 = vmatpush1.msra.mxu0 0.0
        %1156 = vmatprep.subr.mxu0 0.0
        %1157 = vmatpush1.msra.mxu0 0.0
        %1158 = vmatprep.subr.mxu0 0.0
        %1159 = vmatpush1.msra.mxu0 0.0
        %1160 = vmatprep.subr.mxu0 0.0
        %1161 = vmatpush1.msra.mxu0 0.0
        %1162 = vmatprep.subr.mxu0 0.0
        %1163 = vmatpush1.msra.mxu0 0.0
        %1164 = vmatprep.subr.mxu0 0.0
        %1165 = vmatpush1.msra.mxu0 0.0
        %1166 = vmatprep.subr.mxu0 0.0
        %1167 = vmatpush1.msra.mxu0 0.0
        %1168 = vmatprep.subr.mxu0 0.0
        %1169 = vmatpush1.msra.mxu0 0.0
        %1170 = vmatprep.subr.mxu0 0.0
        %1171 = vmatpush1.msra.mxu0 0.0
        %1172 = vmatprep.subr.mxu0 0.0
        %1173 = vmatpush1.msra.mxu0 0.0
        %1174 = vmatprep.subr.mxu0 0.0
        %1175 = vmatpush1.msra.mxu0 0.0
        %1176 = vmatprep.subr.mxu0 0.0
        %1177 = vmatpush1.msra.mxu0 0.0
        %1178 = vmatprep.subr.mxu0 0.0
        %1179 = vmatpush1.msra.mxu0 0.0
        %1180 = vmatprep.mubr.f32.mxu0 0.0
        %1181 = vmatmul.mubr.f32.gmra.mrb[0].mxu0 %v1114
        %v1182 = vpop.f32.mrb[0].mxu0
        %v1183 = vadd.f32 0.0, %v1182
        %v1184 = vpop.f32.mrb[0].mxu0
        %1185 = vdwg.mxu0
        %1187 = vrot.lane.b32.xlu0 %v1183, 8
        %v1188 = vpop.permute.xlu0 %1187
        %vm1190 = vcmask 130112
        %1191 = vst.msk [vmem:[%s1018] sm:$0xff] %vm1190, %v1188
        %1192 = vrot.lane.b32.xlu0 %v685, 112
        %v1193 = vpop.permute.xlu0 %1192
        %1194 = vrot.lane.b32.xlu0 %v769, 112
        %v1195 = vpop.permute.xlu0 %1194
        %v1196 = vsel %vm856, %v1193, 0
        %v1198 = vsel %vm856, %v1195, 0
        %1200 = vmatprep.subr.mxu0 0.0
        %1201 = vmatpush1.xpose.msra.mxu0 %v1198
        %1202 = vmatprep.subr.mxu0 0.0
        %1203 = vmatpush1.xpose.msra.mxu0 0.0
        %1204 = vmatprep.subr.mxu0 0.0
        %1205 = vmatpush1.xpose.msra.mxu0 0.0
        %1206 = vmatprep.subr.mxu0 0.0
        %1207 = vmatpush1.xpose.msra.mxu0 0.0
        %1208 = vmatprep.subr.mxu0 0.0
        %1209 = vmatpush1.xpose.msra.mxu0 0.0
        %1210 = vmatprep.subr.mxu0 0.0
        %1211 = vmatpush1.xpose.msra.mxu0 0.0
        %1212 = vmatprep.subr.mxu0 0.0
        %1213 = vmatpush1.xpose.msra.mxu0 0.0
        %1214 = vmatprep.subr.mxu0 0.0
        %1215 = vmatpush1.xpose.msra.mxu0 0.0
        %1216 = vmatprep.subr.mxu0 0.0
        %1217 = vmatpush1.xpose.msra.mxu0 0.0
        %1218 = vmatprep.subr.mxu0 0.0
        %1219 = vmatpush1.xpose.msra.mxu0 0.0
        %1220 = vmatprep.subr.mxu0 0.0
        %1221 = vmatpush1.xpose.msra.mxu0 0.0
        %1222 = vmatprep.subr.mxu0 0.0
        %1223 = vmatpush1.xpose.msra.mxu0 0.0
        %1224 = vmatprep.subr.mxu0 0.0
        %1225 = vmatpush1.xpose.msra.mxu0 0.0
        %1226 = vmatprep.subr.mxu0 0.0
        %1227 = vmatpush1.xpose.msra.mxu0 0.0
        %1228 = vmatprep.subr.mxu0 0.0
        %1229 = vmatpush1.xpose.msra.mxu0 0.0
        %1230 = vmatprep.subr.mxu0 0.0
        %1231 = vmatpush1.xpose.msra.mxu0 0.0
        %1232 = vmatprep.subr.mxu0 0.0
        %1233 = vmatpush1.xpose.msra.mxu0 0.0
        %1234 = vmatprep.subr.mxu0 0.0
        %1235 = vmatpush1.xpose.msra.mxu0 0.0
        %1236 = vmatprep.subr.mxu0 0.0
        %1237 = vmatpush1.xpose.msra.mxu0 0.0
        %1238 = vmatprep.subr.mxu0 0.0
        %1239 = vmatpush1.xpose.msra.mxu0 0.0
        %1240 = vmatprep.subr.mxu0 0.0
        %1241 = vmatpush1.xpose.msra.mxu0 0.0
        %1242 = vmatprep.subr.mxu0 0.0
        %1243 = vmatpush1.xpose.msra.mxu0 0.0
        %1244 = vmatprep.subr.mxu0 0.0
        %1245 = vmatpush1.xpose.msra.mxu0 0.0
        %1246 = vmatprep.subr.mxu0 0.0
        %1247 = vmatpush1.xpose.msra.mxu0 0.0
        %1248 = vmatprep.subr.mxu0 0.0
        %1249 = vmatpush1.xpose.msra.mxu0 0.0
        %1250 = vmatprep.subr.mxu0 0.0
        %1251 = vmatpush1.xpose.msra.mxu0 0.0
        %1252 = vmatprep.subr.mxu0 0.0
        %1253 = vmatpush1.xpose.msra.mxu0 0.0
        %1254 = vmatprep.subr.mxu0 0.0
        %1255 = vmatpush1.xpose.msra.mxu0 0.0
        %1256 = vmatprep.subr.mxu0 0.0
        %1257 = vmatpush1.xpose.msra.mxu0 0.0
        %1258 = vmatprep.subr.mxu0 0.0
        %1259 = vmatpush1.xpose.msra.mxu0 0.0
        %1260 = vmatprep.subr.mxu0 0.0
        %1261 = vmatpush1.xpose.msra.mxu0 0.0
        %1262 = vmatprep.subr.mxu0 0.0
        %1263 = vmatpush1.xpose.msra.mxu0 0.0
        %1264 = vmatprep.mubr.f32.mxu0 0.0
        %1265 = vmatmul.mubr.f32.gmra.mrb[0].mxu0 %v1196
        %v1266 = vpop.f32.mrb[0].mxu0
        %v1267 = vadd.f32 0.0, %v1266
        %v1268 = vpop.f32.mrb[0].mxu0
        %1269 = vdwg.mxu0
        %v1270 = vsel %vm856, %v1267, -inf
        %1271 = vmax.xlane.f32.xlu0 %v1270
        %v1272 = vpop.xlane.xlu0 %1271
        %v1273 = vsub.f32 %v1267, %v1272
        %v1274 = vmul.f32 %v1273, 1.442695
        %v1275 = vpow.pop %v1274
        %v1276 = vsel %vm856, %v1275, 0.0
        %1277 = vadd.xlane.f32.xlu0 %v1276
        %v1278 = vpop.xlane.xlu0 %1277
        %v1279 = vrcp.pop %v1278
        %v1280 = vmul.f32 %v1275, %v1279
        %1281 = vrot.lane.b32.xlu0 %v853, 112
        %v1282 = vpop.permute.xlu0 %1281
        %v1285 = vsel %vm856, %v1280, 0
        %1287 = vmatprep.subr.mxu0 0.0
        %1288 = vmatpush1.msra.mxu0 %v1282
        %1289 = vmatprep.subr.mxu0 0.0
        %1290 = vmatpush1.msra.mxu0 0.0
        %1291 = vmatprep.subr.mxu0 0.0
        %1292 = vmatpush1.msra.mxu0 0.0
        %1293 = vmatprep.subr.mxu0 0.0
        %1294 = vmatpush1.msra.mxu0 0.0
        %1295 = vmatprep.subr.mxu0 0.0
        %1296 = vmatpush1.msra.mxu0 0.0
        %1297 = vmatprep.subr.mxu0 0.0
        %1298 = vmatpush1.msra.mxu0 0.0
        %1299 = vmatprep.subr.mxu0 0.0
        %1300 = vmatpush1.msra.mxu0 0.0
        %1301 = vmatprep.subr.mxu0 0.0
        %1302 = vmatpush1.msra.mxu0 0.0
        %1303 = vmatprep.subr.mxu0 0.0
        %1304 = vmatpush1.msra.mxu0 0.0
        %1305 = vmatprep.subr.mxu0 0.0
        %1306 = vmatpush1.msra.mxu0 0.0
        %1307 = vmatprep.subr.mxu0 0.0
        %1308 = vmatpush1.msra.mxu0 0.0
        %1309 = vmatprep.subr.mxu0 0.0
        %1310 = vmatpush1.msra.mxu0 0.0
        %1311 = vmatprep.subr.mxu0 0.0
        %1312 = vmatpush1.msra.mxu0 0.0
        %1313 = vmatprep.subr.mxu0 0.0
        %1314 = vmatpush1.msra.mxu0 0.0
        %1315 = vmatprep.subr.mxu0 0.0
        %1316 = vmatpush1.msra.mxu0 0.0
        %1317 = vmatprep.subr.mxu0 0.0
        %1318 = vmatpush1.msra.mxu0 0.0
        %1319 = vmatprep.subr.mxu0 0.0
        %1320 = vmatpush1.msra.mxu0 0.0
        %1321 = vmatprep.subr.mxu0 0.0
        %1322 = vmatpush1.msra.mxu0 0.0
        %1323 = vmatprep.subr.mxu0 0.0
        %1324 = vmatpush1.msra.mxu0 0.0
        %1325 = vmatprep.subr.mxu0 0.0
        %1326 = vmatpush1.msra.mxu0 0.0
        %1327 = vmatprep.subr.mxu0 0.0
        %1328 = vmatpush1.msra.mxu0 0.0
        %1329 = vmatprep.subr.mxu0 0.0
        %1330 = vmatpush1.msra.mxu0 0.0
        %1331 = vmatprep.subr.mxu0 0.0
        %1332 = vmatpush1.msra.mxu0 0.0
        %1333 = vmatprep.subr.mxu0 0.0
        %1334 = vmatpush1.msra.mxu0 0.0
        %1335 = vmatprep.subr.mxu0 0.0
        %1336 = vmatpush1.msra.mxu0 0.0
        %1337 = vmatprep.subr.mxu0 0.0
        %1338 = vmatpush1.msra.mxu0 0.0
        %1339 = vmatprep.subr.mxu0 0.0
        %1340 = vmatpush1.msra.mxu0 0.0
        %1341 = vmatprep.subr.mxu0 0.0
        %1342 = vmatpush1.msra.mxu0 0.0
        %1343 = vmatprep.subr.mxu0 0.0
        %1344 = vmatpush1.msra.mxu0 0.0
        %1345 = vmatprep.subr.mxu0 0.0
        %1346 = vmatpush1.msra.mxu0 0.0
        %1347 = vmatprep.subr.mxu0 0.0
        %1348 = vmatpush1.msra.mxu0 0.0
        %1349 = vmatprep.subr.mxu0 0.0
        %1350 = vmatpush1.msra.mxu0 0.0
        %1351 = vmatprep.mubr.f32.mxu0 0.0
        %1352 = vmatmul.mubr.f32.gmra.mrb[0].mxu0 %v1285
        %v1353 = vpop.f32.mrb[0].mxu0
        %v1354 = vadd.f32 0.0, %v1353
        %v1355 = vpop.f32.mrb[0].mxu0
        %1356 = vdwg.mxu0
        %1358 = vrot.lane.b32.xlu0 %v1354, 16
        %v1359 = vpop.permute.xlu0 %1358
        %vm1361 = vcmask 195712
        %1362 = vst.msk [vmem:[%s1018] sm:$0xff] %vm1361, %v1359
        %1363 = vrot.lane.b32.xlu0 %v685, 104
        %v1364 = vpop.permute.xlu0 %1363
        %1365 = vrot.lane.b32.xlu0 %v769, 104
        %v1366 = vpop.permute.xlu0 %1365
        %v1367 = vsel %vm856, %v1364, 0
        %v1369 = vsel %vm856, %v1366, 0
        %1371 = vmatprep.subr.mxu0 0.0
        %1372 = vmatpush1.xpose.msra.mxu0 %v1369
        %1373 = vmatprep.subr.mxu0 0.0
        %1374 = vmatpush1.xpose.msra.mxu0 0.0
        %1375 = vmatprep.subr.mxu0 0.0
        %1376 = vmatpush1.xpose.msra.mxu0 0.0
        %1377 = vmatprep.subr.mxu0 0.0
        %1378 = vmatpush1.xpose.msra.mxu0 0.0
        %1379 = vmatprep.subr.mxu0 0.0
        %1380 = vmatpush1.xpose.msra.mxu0 0.0
        %1381 = vmatprep.subr.mxu0 0.0
        %1382 = vmatpush1.xpose.msra.mxu0 0.0
        %1383 = vmatprep.subr.mxu0 0.0
        %1384 = vmatpush1.xpose.msra.mxu0 0.0
        %1385 = vmatprep.subr.mxu0 0.0
        %1386 = vmatpush1.xpose.msra.mxu0 0.0
        %1387 = vmatprep.subr.mxu0 0.0
        %1388 = vmatpush1.xpose.msra.mxu0 0.0
        %1389 = vmatprep.subr.mxu0 0.0
        %1390 = vmatpush1.xpose.msra.mxu0 0.0
        %1391 = vmatprep.subr.mxu0 0.0
        %1392 = vmatpush1.xpose.msra.mxu0 0.0
        %1393 = vmatprep.subr.mxu0 0.0
        %1394 = vmatpush1.xpose.msra.mxu0 0.0
        %1395 = vmatprep.subr.mxu0 0.0
        %1396 = vmatpush1.xpose.msra.mxu0 0.0
        %1397 = vmatprep.subr.mxu0 0.0
        %1398 = vmatpush1.xpose.msra.mxu0 0.0
        %1399 = vmatprep.subr.mxu0 0.0
        %1400 = vmatpush1.xpose.msra.mxu0 0.0
        %1401 = vmatprep.subr.mxu0 0.0
        %1402 = vmatpush1.xpose.msra.mxu0 0.0
        %1403 = vmatprep.subr.mxu0 0.0
        %1404 = vmatpush1.xpose.msra.mxu0 0.0
        %1405 = vmatprep.subr.mxu0 0.0
        %1406 = vmatpush1.xpose.msra.mxu0 0.0
        %1407 = vmatprep.subr.mxu0 0.0
        %1408 = vmatpush1.xpose.msra.mxu0 0.0
        %1409 = vmatprep.subr.mxu0 0.0
        %1410 = vmatpush1.xpose.msra.mxu0 0.0
        %1411 = vmatprep.subr.mxu0 0.0
        %1412 = vmatpush1.xpose.msra.mxu0 0.0
        %1413 = vmatprep.subr.mxu0 0.0
        %1414 = vmatpush1.xpose.msra.mxu0 0.0
        %1415 = vmatprep.subr.mxu0 0.0
        %1416 = vmatpush1.xpose.msra.mxu0 0.0
        %1417 = vmatprep.subr.mxu0 0.0
        %1418 = vmatpush1.xpose.msra.mxu0 0.0
        %1419 = vmatprep.subr.mxu0 0.0
        %1420 = vmatpush1.xpose.msra.mxu0 0.0
        %1421 = vmatprep.subr.mxu0 0.0
        %1422 = vmatpush1.xpose.msra.mxu0 0.0
        %1423 = vmatprep.subr.mxu0 0.0
        %1424 = vmatpush1.xpose.msra.mxu0 0.0
        %1425 = vmatprep.subr.mxu0 0.0
        %1426 = vmatpush1.xpose.msra.mxu0 0.0
        %1427 = vmatprep.subr.mxu0 0.0
        %1428 = vmatpush1.xpose.msra.mxu0 0.0
        %1429 = vmatprep.subr.mxu0 0.0
        %1430 = vmatpush1.xpose.msra.mxu0 0.0
        %1431 = vmatprep.subr.mxu0 0.0
        %1432 = vmatpush1.xpose.msra.mxu0 0.0
        %1433 = vmatprep.subr.mxu0 0.0
        %1434 = vmatpush1.xpose.msra.mxu0 0.0
        %1435 = vmatprep.mubr.f32.mxu0 0.0
        %1436 = vmatmul.mubr.f32.gmra.mrb[0].mxu0 %v1367
        %v1437 = vpop.f32.mrb[0].mxu0
        %v1438 = vadd.f32 0.0, %v1437
        %v1439 = vpop.f32.mrb[0].mxu0
        %1440 = vdwg.mxu0
        %v1441 = vsel %vm856, %v1438, -inf
        %1442 = vmax.xlane.f32.xlu0 %v1441
        %v1443 = vpop.xlane.xlu0 %1442
        %v1444 = vsub.f32 %v1438, %v1443
        %v1445 = vmul.f32 %v1444, 1.442695
        %v1446 = vpow.pop %v1445
        %v1447 = vsel %vm856, %v1446, 0.0
        %1448 = vadd.xlane.f32.xlu0 %v1447
        %v1449 = vpop.xlane.xlu0 %1448
        %v1450 = vrcp.pop %v1449
        %v1451 = vmul.f32 %v1446, %v1450
        %1452 = vrot.lane.b32.xlu0 %v853, 104
        %v1453 = vpop.permute.xlu0 %1452
        %v1456 = vsel %vm856, %v1451, 0
        %1458 = vmatprep.subr.mxu0 0.0
        %1459 = vmatpush1.msra.mxu0 %v1453
        %1460 = vmatprep.subr.mxu0 0.0
        %1461 = vmatpush1.msra.mxu0 0.0
        %1462 = vmatprep.subr.mxu0 0.0
        %1463 = vmatpush1.msra.mxu0 0.0
        %1464 = vmatprep.subr.mxu0 0.0
        %1465 = vmatpush1.msra.mxu0 0.0
        %1466 = vmatprep.subr.mxu0 0.0
        %1467 = vmatpush1.msra.mxu0 0.0
        %1468 = vmatprep.subr.mxu0 0.0
        %1469 = vmatpush1.msra.mxu0 0.0
        %1470 = vmatprep.subr.mxu0 0.0
        %1471 = vmatpush1.msra.mxu0 0.0
        %1472 = vmatprep.subr.mxu0 0.0
        %1473 = vmatpush1.msra.mxu0 0.0
        %1474 = vmatprep.subr.mxu0 0.0
        %1475 = vmatpush1.msra.mxu0 0.0
        %1476 = vmatprep.subr.mxu0 0.0
        %1477 = vmatpush1.msra.mxu0 0.0
        %1478 = vmatprep.subr.mxu0 0.0
        %1479 = vmatpush1.msra.mxu0 0.0
        %1480 = vmatprep.subr.mxu0 0.0
        %1481 = vmatpush1.msra.mxu0 0.0
        %1482 = vmatprep.subr.mxu0 0.0
        %1483 = vmatpush1.msra.mxu0 0.0
        %1484 = vmatprep.subr.mxu0 0.0
        %1485 = vmatpush1.msra.mxu0 0.0
        %1486 = vmatprep.subr.mxu0 0.0
        %1487 = vmatpush1.msra.mxu0 0.0
        %1488 = vmatprep.subr.mxu0 0.0
        %1489 = vmatpush1.msra.mxu0 0.0
        %1490 = vmatprep.subr.mxu0 0.0
        %1491 = vmatpush1.msra.mxu0 0.0
        %1492 = vmatprep.subr.mxu0 0.0
        %1493 = vmatpush1.msra.mxu0 0.0
        %1494 = vmatprep.subr.mxu0 0.0
        %1495 = vmatpush1.msra.mxu0 0.0
        %1496 = vmatprep.subr.mxu0 0.0
        %1497 = vmatpush1.msra.mxu0 0.0
        %1498 = vmatprep.subr.mxu0 0.0
        %1499 = vmatpush1.msra.mxu0 0.0
        %1500 = vmatprep.subr.mxu0 0.0
        %1501 = vmatpush1.msra.mxu0 0.0
        %1502 = vmatprep.subr.mxu0 0.0
        %1503 = vmatpush1.msra.mxu0 0.0
        %1504 = vmatprep.subr.mxu0 0.0
        %1505 = vmatpush1.msra.mxu0 0.0
        %1506 = vmatprep.subr.mxu0 0.0
        %1507 = vmatpush1.msra.mxu0 0.0
        %1508 = vmatprep.subr.mxu0 0.0
        %1509 = vmatpush1.msra.mxu0 0.0
        %1510 = vmatprep.subr.mxu0 0.0
        %1511 = vmatpush1.msra.mxu0 0.0
        %1512 = vmatprep.subr.mxu0 0.0
        %1513 = vmatpush1.msra.mxu0 0.0
        %1514 = vmatprep.subr.mxu0 0.0
        %1515 = vmatpush1.msra.mxu0 0.0
        %1516 = vmatprep.subr.mxu0 0.0
        %1517 = vmatpush1.msra.mxu0 0.0
        %1518 = vmatprep.subr.mxu0 0.0
        %1519 = vmatpush1.msra.mxu0 0.0
        %1520 = vmatprep.subr.mxu0 0.0
        %1521 = vmatpush1.msra.mxu0 0.0
        %1522 = vmatprep.mubr.f32.mxu0 0.0
        %1523 = vmatmul.mubr.f32.gmra.mrb[0].mxu0 %v1456
        %v1524 = vpop.f32.mrb[0].mxu0
        %v1525 = vadd.f32 0.0, %v1524
        %v1526 = vpop.f32.mrb[0].mxu0
        %1527 = vdwg.mxu0
        %1529 = vrot.lane.b32.xlu0 %v1525, 24
        %v1530 = vpop.permute.xlu0 %1529
        %vm1532 = vcmask 261312
        %1533 = vst.msk [vmem:[%s1018] sm:$0xff] %vm1532, %v1530
        %p1534 = scmp.eq.s32.totalorder %s38, 0
        // Predicated region
        $region93: #{tpu_custom_call.1} parent=63 // pred_check
          %p1535 = pneg %p1534
        $region94: #{tpu_custom_call.1} parent=63 // pred_check_branch
          %1537 = sbr.rel (%p1535) target = $region96
        $region95: #{tpu_custom_call.1} parent=63 // pred_region
          %v1538 = vld [vmem:[#allocation2] sm:$0xff]
          %v1539 = vld [vmem:[%s9] sm:$0xff]
          %v1540 = vld [vmem:[%s9 + $0x8] sm:$0xff]
          %v1541 = vld [vmem:[%s9 + $0x10] sm:$0xff]
          %v1542 = vld [vmem:[%s9 + $0x18] sm:$0xff]
          %v1543 = vld [vmem:[%s10] sm:$0x1]
          %v1545 = vlaneseq
          %v1546 = vshrl.u32 %v1545, 7
          %v1547 = vsub.s32 0, %v1546
          %v1548 = vrot.slane %v1543, %v1547
          %v1551 = vsel %vm614, %v1538, 0
          %1553 = vmatprep.subr.mxu0 0.0
          %1554 = vmatpush1.msra.mxu0 %v1539
          %1555 = vmatprep.subr.mxu0 0.0
          %1556 = vmatpush1.msra.mxu0 %v1540
          %1557 = vmatprep.subr.mxu0 0.0
          %1558 = vmatpush1.msra.mxu0 %v1541
          %1559 = vmatprep.subr.mxu0 0.0
          %1560 = vmatpush1.msra.mxu0 %v1542
          %1561 = vmatprep.subr.mxu0 0.0
          %1562 = vmatpush1.msra.mxu0 0.0
          %1563 = vmatprep.subr.mxu0 0.0
          %1564 = vmatpush1.msra.mxu0 0.0
          %1565 = vmatprep.subr.mxu0 0.0
          %1566 = vmatpush1.msra.mxu0 0.0
          %1567 = vmatprep.subr.mxu0 0.0
          %1568 = vmatpush1.msra.mxu0 0.0
          %1569 = vmatprep.subr.mxu0 0.0
          %1570 = vmatpush1.msra.mxu0 0.0
          %1571 = vmatprep.subr.mxu0 0.0
          %1572 = vmatpush1.msra.mxu0 0.0
          %1573 = vmatprep.subr.mxu0 0.0
          %1574 = vmatpush1.msra.mxu0 0.0
          %1575 = vmatprep.subr.mxu0 0.0
          %1576 = vmatpush1.msra.mxu0 0.0
          %1577 = vmatprep.subr.mxu0 0.0
          %1578 = vmatpush1.msra.mxu0 0.0
          %1579 = vmatprep.subr.mxu0 0.0
          %1580 = vmatpush1.msra.mxu0 0.0
          %1581 = vmatprep.subr.mxu0 0.0
          %1582 = vmatpush1.msra.mxu0 0.0
          %1583 = vmatprep.subr.mxu0 0.0
          %1584 = vmatpush1.msra.mxu0 0.0
          %1585 = vmatprep.subr.mxu0 0.0
          %1586 = vmatpush1.msra.mxu0 0.0
          %1587 = vmatprep.subr.mxu0 0.0
          %1588 = vmatpush1.msra.mxu0 0.0
          %1589 = vmatprep.subr.mxu0 0.0
          %1590 = vmatpush1.msra.mxu0 0.0
          %1591 = vmatprep.subr.mxu0 0.0
          %1592 = vmatpush1.msra.mxu0 0.0
          %1593 = vmatprep.subr.mxu0 0.0
          %1594 = vmatpush1.msra.mxu0 0.0
          %1595 = vmatprep.subr.mxu0 0.0
          %1596 = vmatpush1.msra.mxu0 0.0
          %1597 = vmatprep.subr.mxu0 0.0
          %1598 = vmatpush1.msra.mxu0 0.0
          %1599 = vmatprep.subr.mxu0 0.0
          %1600 = vmatpush1.msra.mxu0 0.0
          %1601 = vmatprep.subr.mxu0 0.0
          %1602 = vmatpush1.msra.mxu0 0.0
          %1603 = vmatprep.subr.mxu0 0.0
          %1604 = vmatpush1.msra.mxu0 0.0
          %1605 = vmatprep.subr.mxu0 0.0
          %1606 = vmatpush1.msra.mxu0 0.0
          %1607 = vmatprep.subr.mxu0 0.0
          %1608 = vmatpush1.msra.mxu0 0.0
          %1609 = vmatprep.subr.mxu0 0.0
          %1610 = vmatpush1.msra.mxu0 0.0
          %1611 = vmatprep.subr.mxu0 0.0
          %1612 = vmatpush1.msra.mxu0 0.0
          %1613 = vmatprep.subr.mxu0 0.0
          %1614 = vmatpush1.msra.mxu0 0.0
          %1615 = vmatprep.subr.mxu0 0.0
          %1616 = vmatpush1.msra.mxu0 0.0
          %1617 = vmatprep.mubr.f32.mxu0 0.0
          %1618 = vmatmul.mubr.f32.gmra.mrb[0].mxu0 %v1551
          %v1619 = vpop.f32.mrb[0].mxu0
          %v1620 = vadd.f32 %v1548, %v1619
          %v1621 = vpop.f32.mrb[0].mxu0
          %1622 = vdwg.mxu0
          %1623 = vst.msk [vmem:[%s593] sm:$0xff] %vm614, %v1620
        $region96: #{tpu_custom_call.1} parent=63 // pred_fallthru
          _
        %s1624 = sand.u32 %s329, 1
        %s1625 = scalar_lea.sflag [#allocation5], %s1624
        %s1626 = sand.u32 %s329, 1
        %s1627 = smul.addr %s1626, 8
        %s1628 = scalar_lea.vmem [#allocation15], %s1627
        // Predicated region
        $region97: #{tpu_custom_call.1} parent=63 // pred_check
          %p1629 = pneg %p339
        $region98: #{tpu_custom_call.1} parent=63 // pred_check_branch
          %1631 = sbr.rel (%p1629) target = $region100
        $region99: #{tpu_custom_call.1} parent=63 // pred_region
          %s1633 = ssub.s32 128, 128
          %1634 = vsyncadd %s1625, %s1633
          %s1635 = smul.addr %s37, 128
          %s1636 = scalar_lea.hbm %s11, %s1635
          %s1638 = sshll.u32 %s1628, 4
          %s1639 = int_to_ptr.vmem [resolvable:$true] %s1638
          %1641 = dma.vmem_to_hbm [thread:$0]  %s1639, 128, %s1636, %s1625
        $region100: #{tpu_custom_call.1} parent=63 // pred_fallthru
          _
      $region64: #{tpu_custom_call.1} parent=5 // pred_fallthru
        _
      %p1642 = scmp.le.s32.totalorder 2, %s28
      // Predicated region
      $region101: #{tpu_custom_call.1} parent=5 // pred_check
        %p1643 = pneg %p1642
      $region102: #{tpu_custom_call.1} parent=5 // pred_check_branch
        %1645 = sbr.rel (%p1643) target = $region104
      $region103: #{tpu_custom_call.1} parent=5 // pred_region
        %s1646 = ssub.s32 %s28, 2
        // Predicated region
        $region105: #{tpu_custom_call.1} parent=103 // pred_check
          %p1647 = pneg %p345
        $region106: #{tpu_custom_call.1} parent=103 // pred_check_branch
          %1649 = sbr.rel (%p1647) target = $region108
        $region107: #{tpu_custom_call.1} parent=103 // pred_region
          %s1650 = sand.u32 %s330, 1
          %s1651 = scalar_lea.sflag [#allocation5], %s1650
          %s1652 = sand.u32 %s330, 1
          %s1653 = smul.addr %s1652, 8
          %s1654 = scalar_lea.vmem [#allocation15], %s1653
          %1655 = dma.done %s1651, 128
        $region108: #{tpu_custom_call.1} parent=103 // pred_fallthru
          _
      $region104: #{tpu_custom_call.1} parent=5 // pred_fallthru
        _
    $region6: #{tpu_custom_call.1} parent=1 // loop_footer
      %s32 = sadd.s32 1, %s28
    $region7: #{tpu_custom_call.1} parent=1 // loop_footer_branch
      %27 = sbr.rel target = $region3
    $region8: #{tpu_custom_call.1} parent=1 // loop_exit
      _
    %1656 = vsyncpa [#allocation4], 1
    %s1657 = scalar_lea.sflag [#allocation4], 1
    %1658 = vsyncpa %s1657, 1
    %1659 = vsyncpa [#allocation7], 1
    %s1660 = scalar_lea.sflag [#allocation7], 1
    %1661 = vsyncpa %s1660, 1
    %1662 = vsyncpa [#allocation10], 1
    %1663 = vsyncpa [#allocation13], 1
    %1664 = vsyncpa [#allocation5], 1
    %s1665 = scalar_lea.sflag [#allocation5], 1
    %1666 = vsyncpa %s1665, 1

</llo_original>
